<compile_context>
chip_gen: v7x
topology: tpu7x:2x2x1
jax: 0.10.0
libtpu: 0.0.40
codegen_flags: <defaults>
</compile_context>

<pallas_src>
import jax
import jax.numpy as jnp
from jax.experimental import pallas as pl
from jax.experimental.pallas import tpu as pltpu

BN_EPS = 1e-5


# ---------------------------------------------------------------------------
# Hardware-aware sizing helpers
# ---------------------------------------------------------------------------
def _vmem_capacity_bytes(default=64 * 1024 * 1024):
    """Per-core VMEM capacity (64 MiB v7x, 128 MiB v5e/v6e); conservative fallback."""
    try:
        return int(pltpu.get_tpu_info().vmem_capacity_bytes)
    except Exception:
        return default


def _pick_seq_tile(B, S, Ht, hidden_itemsize, mask_itemsize, budget_bytes):
    """Largest sequence tile whose double-buffered streaming blocks fit the budget.

    The mask block's minor-dim padding (1 -> 128 lanes in VMEM) is accounted for
    explicitly. Tiles are multiples of 128 rows; if the whole sequence fits, use it.
    No divisibility of S is required (ragged final tiles are guarded in-kernel).
    """
    per_row = 2 * B * (Ht * hidden_itemsize + 128 * mask_itemsize)
    if S * per_row <= budget_bytes:
        return int(S)
    ts = (budget_bytes // per_row) // 128 * 128
    return int(max(ts, 128))


# ---------------------------------------------------------------------------
# Phase 1: HBM-bound masked-sum pooling (streamed, core-sharded over H)
# ---------------------------------------------------------------------------
def _make_pool_kernel(S, seq_tile, ragged):
    def kernel(mask_ref, h_ref, psum_ref, cnt_ref):
        s = pl.program_id(1)

        @pl.when(s == 0)
        def _init():
            psum_ref[...] = jnp.zeros_like(psum_ref)
            cnt_ref[...] = jnp.zeros_like(cnt_ref)

        m = mask_ref[...].astype(jnp.float32)          # [B, TS, 1]  (0/1)
        h = h_ref[...].astype(jnp.float32)             # [B, TS, Ht]

        if ragged:
            # Final partial tile: zero rows past the true sequence length so the
            # stale tail of the VMEM buffer cannot contribute (where, not multiply,
            # so even NaN garbage is safe).
            row = s * seq_tile + jax.lax.broadcasted_iota(
                jnp.int32, (1, seq_tile, 1), 1)
            valid = row < S
            m = jnp.where(valid, m, 0.0)
            h = jnp.where(valid, h, 0.0)

        # 'avg' pooler numerator: sum_s mask[b,s] * h[b,s,:]  (accumulated in f32
        # directly in the resident output block)
        psum_ref[...] += jnp.sum(h * m, axis=1)        # [B, Ht]
        # token count (identical across H shards; each shard writes its own slot)
        cnt_ref[...] += jnp.sum(m, axis=1)[None, :, :]  # [1, B, 1]

    return kernel


# ---------------------------------------------------------------------------
# Phase 2: tiny epilogue (divide + projector + predictor with full-batch BN)
# ---------------------------------------------------------------------------
def _epilogue_kernel(cnt_ref, psum_ref,
                     wproj_ref, bproj_ref,
                     w1_ref, gamma_ref, beta_ref,
                     w2_ref, b2_ref,
                     emb_ref, proj_ref, pred_ref):
    count = cnt_ref[0]                                  # [B, 1]
    denom = jnp.maximum(count, 1e-9)                    # guard all-pad rows
    emb = psum_ref[...] / denom                         # [B, H]
    emb_ref[...] = emb.astype(emb_ref.dtype)

    # projector: Linear + Tanh
    proj = jnp.tanh(
        jnp.dot(emb, wproj_ref[...], preferred_element_type=jnp.float32)
        + bproj_ref[...])                               # [B, P]
    proj_ref[...] = proj.astype(proj_ref.dtype)

    # predictor: Linear(no bias) + BatchNorm1d (train-mode batch stats) + ReLU + Linear
    z = jnp.dot(proj, w1_ref[...], preferred_element_type=jnp.float32)   # [B, D]
    mu = jnp.mean(z, axis=0, keepdims=True)
    var = jnp.mean((z - mu) ** 2, axis=0, keepdims=True)   # biased, like torch BN fwd
    zhat = (z - mu) * jax.lax.rsqrt(var + BN_EPS) * gamma_ref[...] + beta_ref[...]
    zhat = jnp.maximum(zhat, 0.0)                        # ReLU
    pred = (jnp.dot(zhat, w2_ref[...], preferred_element_type=jnp.float32)
            + b2_ref[...])                               # [B, H]
    pred_ref[...] = pred.astype(pred_ref.dtype)


# ---------------------------------------------------------------------------
# Wrapper
# ---------------------------------------------------------------------------
def sentence_representation_extractor(attention_mask, last_hidden_state,
                                      w_proj, b_proj, w1, gamma, beta, w2, b2,
                                      *, seq_tile=None, h_shards=None):
    B, S, H = last_hidden_state.shape
    P = w_proj.shape[1]
    D = w1.shape[1]

    if h_shards is None:
        # 2 lane-dense H shards let the pooling phase spread over the two
        # TensorCores on v7x; roughly neutral on single-core v5e/v6e.
        h_shards = 2 if (H % 256 == 0) else 1
    if h_shards > 1:
        assert H % h_shards == 0 and (H // h_shards) % 128 == 0, \
            "H shards must be lane-dense (multiples of 128)"
    Ht = H // h_shards

    hidden_itemsize = jnp.dtype(last_hidden_state.dtype).itemsize
    mask_itemsize = 2  # bf16 mask stream

    cap = _vmem_capacity_bytes()
    if seq_tile is None:
        seq_tile = _pick_seq_tile(B, S, Ht, hidden_itemsize, mask_itemsize,
                                  budget_bytes=int(cap * 0.70))
    assert seq_tile == S or seq_tile % 8 == 0, \
        "seq_tile must be a multiple of 8 (or the full sequence length)"
    n_seq = pl.cdiv(S, seq_tile)
    ragged = (S % seq_tile) != 0

    # Tiny-array cast only (B*S elements); the big activation is NOT pre-cast.
    mask3d = attention_mask.astype(jnp.bfloat16).reshape(B, S, 1)

    # VMEM accounting for the streaming phase (mask lane padding 1->128 included).
    pool_bytes = (2 * B * seq_tile * Ht * hidden_itemsize      # hidden double buffer
                  + 2 * B * seq_tile * 128 * mask_itemsize     # mask buffer (lane pad)
                  + 2 * max(B, 8) * Ht * 4                     # resident psum block
                  + 2 * 8 * 128 * 4)                           # resident count block
    pool_limit = int(min(max(pool_bytes + (4 << 20), 16 << 20), int(cap * 0.85)))

    pooled_sum, counts = pl.pallas_call(
        _make_pool_kernel(S, seq_tile, ragged),
        grid=(h_shards, n_seq),
        in_specs=[
            pl.BlockSpec((B, seq_tile, 1), lambda hs, s: (0, s, 0)),    # mask
            pl.BlockSpec((B, seq_tile, Ht), lambda hs, s: (0, s, hs)),  # hidden state
        ],
        out_specs=[
            pl.BlockSpec((B, Ht), lambda hs, s: (0, hs)),          # masked sum
            pl.BlockSpec((1, B, 1), lambda hs, s: (hs, 0, 0)),     # token counts
        ],
        out_shape=[
            jax.ShapeDtypeStruct((B, H), jnp.float32),
            jax.ShapeDtypeStruct((h_shards, B, 1), jnp.float32),
        ],
        compiler_params=pltpu.CompilerParams(
            dimension_semantics=("parallel", "arbitrary"),
            vmem_limit_bytes=pool_limit),
    )(mask3d, last_hidden_state)

    # Epilogue: everything is tiny (B x {H,P,D}); single grid step.
    weight_bytes = 4 * (H * P + P + P * D + 2 * D + D * H + H)
    epi_bytes = 2 * (weight_bytes + 4 * (B * H + h_shards * 8 * 128)) \
        + 2 * 4 * (2 * B * H + B * P)
    epi_limit = int(min(max(epi_bytes + (4 << 20), 16 << 20), int(cap * 0.85)))

    c2d = lambda shape: pl.BlockSpec(shape, lambda i: (0, 0))
    emb, proj, pred = pl.pallas_call(
        _epilogue_kernel,
        grid=(1,),
        in_specs=[
            pl.BlockSpec((h_shards, B, 1), lambda i: (0, 0, 0)),   # token counts
            c2d((B, H)),          # pooled masked sum
            c2d((H, P)),          # projector weight (pre-transposed)
            c2d((1, P)),          # projector bias
            c2d((P, D)),          # predictor W1 (pre-transposed)
            c2d((1, D)),          # BN gamma
            c2d((1, D)),          # BN beta
            c2d((D, H)),          # predictor W2 (pre-transposed)
            c2d((1, H)),          # predictor b2
        ],
        out_specs=[c2d((B, H)), c2d((B, P)), c2d((B, H))],
        out_shape=[
            jax.ShapeDtypeStruct((B, H), jnp.float32),
            jax.ShapeDtypeStruct((B, P), jnp.float32),
            jax.ShapeDtypeStruct((B, H), jnp.float32),
        ],
        compiler_params=pltpu.CompilerParams(
            dimension_semantics=("arbitrary",),
            vmem_limit_bytes=epi_limit),
    )(counts, pooled_sum, w_proj, b_proj, w1, gamma, beta, w2, b2)

    return emb, proj, pred


# ---------------------------------------------------------------------------
# Pure-JAX reference (f32 everywhere, mirrors the module's math)
# ---------------------------------------------------------------------------
def _reference(attention_mask, last_hidden_state, w_proj, b_proj, w1, gamma, beta,
               w2, b2):
    h = last_hidden_state.astype(jnp.float32) * attention_mask[:, :, None]
    denom = jnp.maximum(attention_mask.sum(-1, keepdims=True), 1e-9)
    emb = h.sum(1) / denom
    proj = jnp.tanh(emb @ w_proj + b_proj)
    z = proj @ w1
    mu = z.mean(0, keepdims=True)
    var = ((z - mu) ** 2).mean(0, keepdims=True)
    zhat = (z - mu) * jax.lax.rsqrt(var + BN_EPS) * gamma + beta
    pred = jnp.maximum(zhat, 0.0) @ w2 + b2
    return emb, proj, pred


if __name__ == "__main__":
    # Small but representative, lane-dense shapes.
    B, S, H = 8, 512, 256      # batch, seq, config.hidden_size
    P = 128                    # projector hidden_size
    D = 256                    # predictor hidden_size
    SEQ_TILE = 128             # forces 4 pipelined seq steps x 2 H shards

    key = jax.random.PRNGKey(0)
    k_h, k_wp, k_bp, k_w1, k_g, k_b, k_w2, k_b2 = jax.random.split(key, 8)

    last_hidden_state = jax.random.normal(k_h, (B, S, H), dtype=jnp.float32)

    # deterministic prefix mask: first (5 + 37*b) tokens valid per batch row
    lengths = jnp.array([5 + 37 * b for b in range(B)], dtype=jnp.int32)
    attention_mask = (jnp.arange(S)[None, :] < lengths[:, None]).astype(jnp.float32)

    # deterministic synthetic parameters (pre-transposed (in, out) layout)
    w_proj = 0.1 * jax.random.normal(k_wp, (H, P), dtype=jnp.float32)
    b_proj = 0.1 * jax.random.normal(k_bp, (1, P), dtype=jnp.float32)
    w1     = 0.1 * jax.random.normal(k_w1, (P, D), dtype=jnp.float32)
    gamma  = 1.0 + 0.05 * jax.random.normal(k_g, (1, D), dtype=jnp.float32)
    beta   = 0.05 * jax.random.normal(k_b, (1, D), dtype=jnp.float32)
    w2     = 0.1 * jax.random.normal(k_w2, (D, H), dtype=jnp.float32)
    b2     = 0.1 * jax.random.normal(k_b2, (1, H), dtype=jnp.float32)

    # --- test 1: S divisible by the tile --------------------------------------
    emb, proj, pred = sentence_representation_extractor(
        attention_mask, last_hidden_state, w_proj, b_proj, w1, gamma, beta, w2, b2,
        seq_tile=SEQ_TILE)
    jax.block_until_ready((emb, proj, pred))

    ref_emb, ref_proj, ref_pred = _reference(
        attention_mask, last_hidden_state, w_proj, b_proj, w1, gamma, beta, w2, b2)

    assert jnp.allclose(emb, ref_emb, atol=1e-4, rtol=1e-4)
    assert jnp.allclose(proj, ref_proj, atol=1e-4, rtol=1e-4)
    assert jnp.allclose(pred, ref_pred, atol=1e-3, rtol=1e-3)

    # --- test 2: ragged sequence (S not a multiple of the tile) ---------------
    S2 = 320                                    # 2 full tiles + a 64-row partial tile
    lhs2 = last_hidden_state[:, :S2, :]
    mask2 = (jnp.arange(S2)[None, :] < lengths[:, None]).astype(jnp.float32)

    emb2, proj2, pred2 = sentence_representation_extractor(
        mask2, lhs2, w_proj, b_proj, w1, gamma, beta, w2, b2, seq_tile=SEQ_TILE)
    jax.block_until_ready((emb2, proj2, pred2))

    ref_emb2, ref_proj2, ref_pred2 = _reference(
        mask2, lhs2, w_proj, b_proj, w1, gamma, beta, w2, b2)

    assert jnp.allclose(emb2, ref_emb2, atol=1e-4, rtol=1e-4)
    assert jnp.allclose(proj2, ref_proj2, atol=1e-4, rtol=1e-4)
    assert jnp.allclose(pred2, ref_pred2, atol=1e-3, rtol=1e-3)

    print("KERNEL_OK")
</pallas_src>

<mosaic_0001>
module attributes {stable_mosaic.version = 11 : i64} {
  func.func @kernel(%arg0: i32, %arg1: i32, %arg2: memref<8x128x1xbf16, #tpu.memory_space<vmem>>, %arg3: memref<8x128x128xf32, #tpu.memory_space<vmem>>, %arg4: memref<8x128xf32, #tpu.memory_space<vmem>>, %arg5: memref<1x8x1xf32, #tpu.memory_space<vmem>>) attributes {dimension_semantics = [#tpu.dimension_semantics<parallel>, #tpu.dimension_semantics<arbitrary>], iteration_bounds = array<i64: 2, 4>, scalar_prefetch = 0 : i64, scratch_operands = 0 : i64, tpu.core_type = #tpu.core_type<tc>, window_params = [{transform_indices = @transform_0, window_bounds = array<i64: 8, 128, 1>}, {transform_indices = @transform_1, window_bounds = array<i64: 8, 128, 128>}, {transform_indices = @transform_2, window_bounds = array<i64: 8, 128>}, {transform_indices = @transform_3, window_bounds = array<i64: 1, 8, 1>}]} {
    %c0_i32 = arith.constant 0 : i32
    %0 = arith.cmpi eq, %arg1, %c0_i32 : i32
    %1 = arith.extui %0 : i1 to i32
    %c0_i32_0 = arith.constant 0 : i32
    %2 = arith.cmpi ne, %1, %c0_i32_0 : i32
    scf.if %2 {
      %cst_17 = arith.constant 0.000000e+00 : f32
      %17 = vector.broadcast %cst_17 : f32 to vector<8x128xf32>
      %c0_18 = arith.constant 0 : index
      %c0_19 = arith.constant 0 : index
      %18 = vector.load %arg4[%c0_18, %c0_19] : memref<8x128xf32, #tpu.memory_space<vmem>>, vector<8x128xf32>
      tpu.vector_store %arg4[%c0_18, %c0_19], %17 {strides = array<i32>} : memref<8x128xf32, #tpu.memory_space<vmem>>, vector<8x128xf32>,
      %cst_20 = arith.constant 0.000000e+00 : f32
      %19 = vector.broadcast %cst_20 : f32 to vector<1x8x1xf32>
      %c0_21 = arith.constant 0 : index
      %c0_22 = arith.constant 0 : index
      %c0_23 = arith.constant 0 : index
      %20 = vector.load %arg5[%c0_21, %c0_22, %c0_23] : memref<1x8x1xf32, #tpu.memory_space<vmem>>, vector<1x8x1xf32>
      tpu.vector_store %arg5[%c0_21, %c0_22, %c0_23], %19 {strides = array<i32>} : memref<1x8x1xf32, #tpu.memory_space<vmem>>, vector<1x8x1xf32>,
    } else {
    }
    %c0 = arith.constant 0 : index
    %c0_1 = arith.constant 0 : index
    %c0_2 = arith.constant 0 : index
    %3 = vector.load %arg2[%c0, %c0_1, %c0_2] : memref<8x128x1xbf16, #tpu.memory_space<vmem>>, vector<8x128x1xbf16>
    %4 = arith.extf %3 : vector<8x128x1xbf16> to vector<8x128x1xf32>
    %c0_3 = arith.constant 0 : index
    %c0_4 = arith.constant 0 : index
    %c0_5 = arith.constant 0 : index
    %5 = vector.load %arg3[%c0_3, %c0_4, %c0_5] : memref<8x128x128xf32, #tpu.memory_space<vmem>>, vector<8x128x128xf32>
    %c0_6 = arith.constant 0 : index
    %c0_7 = arith.constant 0 : index
    %6 = vector.load %arg4[%c0_6, %c0_7] : memref<8x128xf32, #tpu.memory_space<vmem>>, vector<8x128xf32>
    %7 = vector.broadcast %4 : vector<8x128x1xf32> to vector<8x128x128xf32>
    %8 = arith.mulf %5, %7 : vector<8x128x128xf32>
    %cst = arith.constant dense<0.000000e+00> : vector<8x128xf32>
    %9 = vector.multi_reduction <add>, %8, %cst [1] : vector<8x128x128xf32> to vector<8x128xf32>
    %10 = arith.addf %6, %9 : vector<8x128xf32>
    %c0_8 = arith.constant 0 : index
    %c0_9 = arith.constant 0 : index
    %11 = vector.load %arg4[%c0_8, %c0_9] : memref<8x128xf32, #tpu.memory_space<vmem>>, vector<8x128xf32>
    tpu.vector_store %arg4[%c0_8, %c0_9], %10 {strides = array<i32>} : memref<8x128xf32, #tpu.memory_space<vmem>>, vector<8x128xf32>,
    %c0_10 = arith.constant 0 : index
    %c0_11 = arith.constant 0 : index
    %c0_12 = arith.constant 0 : index
    %12 = vector.load %arg5[%c0_10, %c0_11, %c0_12] : memref<1x8x1xf32, #tpu.memory_space<vmem>>, vector<1x8x1xf32>
    %cst_13 = arith.constant dense<0.000000e+00> : vector<8x1xf32>
    %13 = vector.multi_reduction <add>, %4, %cst_13 [1] : vector<8x128x1xf32> to vector<8x1xf32>
    %14 = vector.shape_cast %13 : vector<8x1xf32> to vector<1x8x1xf32>
    %15 = arith.addf %12, %14 : vector<1x8x1xf32>
    %c0_14 = arith.constant 0 : index
    %c0_15 = arith.constant 0 : index
    %c0_16 = arith.constant 0 : index
    %16 = vector.load %arg5[%c0_14, %c0_15, %c0_16] : memref<1x8x1xf32, #tpu.memory_space<vmem>>, vector<1x8x1xf32>
    tpu.vector_store %arg5[%c0_14, %c0_15, %c0_16], %15 {strides = array<i32>} : memref<1x8x1xf32, #tpu.memory_space<vmem>>, vector<1x8x1xf32>,
    return
  }
  func.func @transform_0(%arg0: i32, %arg1: i32) -> (i32, i32, i32) {
    %c0_i32 = arith.constant 0 : i32
    %c0_i32_0 = arith.constant 0 : i32
    %c0_i32_1 = arith.constant 0 : i32
    return %c0_i32, %arg1, %c0_i32_0 : i32, i32, i32
  }
  func.func @transform_1(%arg0: i32, %arg1: i32) -> (i32, i32, i32) {
    %c0_i32 = arith.constant 0 : i32
    %c0_i32_0 = arith.constant 0 : i32
    return %c0_i32, %arg1, %arg0 : i32, i32, i32
  }
  func.func @transform_2(%arg0: i32, %arg1: i32) -> (i32, i32) {
    %c0_i32 = arith.constant 0 : i32
    %c0_i32_0 = arith.constant 0 : i32
    return %c0_i32, %arg0 : i32, i32
  }
  func.func @transform_3(%arg0: i32, %arg1: i32) -> (i32, i32, i32) {
    %c0_i32 = arith.constant 0 : i32
    %c0_i32_0 = arith.constant 0 : i32
    %c0_i32_1 = arith.constant 0 : i32
    return %arg0, %c0_i32, %c0_i32_0 : i32, i32, i32
  }
}

</mosaic_0001>

<llo_original>
// kernel: tpu_custom_call.1
$region0: #{tpu_custom_call.1}
  #allocation0 [shape = 'u32[]', space=smem, size = 0x4, offset = 0x4, fixed_abs, tag = 'smem constant byte address 0x4 - core index']
  #allocation1 [shape = 'u32[144,128]{1,0:T(1,128)}', space=vmem, size = 0x12000, scoped, tag = 'internal scratch']
  #allocation7 [shape = 's32[]', space=sflag, size = 0x4, offset = 0, fixed_abs, tag = 'sflag constant byte address 0x0 - dummy sync flag']
  %s0 = inlined_call_operand.vmem [shape: bf16[8,512,1], index: 0, kind: input, shape index: {}]
  %s1 = inlined_call_operand.hbm [shape: f32[8,512,256], index: 1, kind: input, shape index: {}]
  %s2 = inlined_call_operand.hbm [shape: f32[8,256], index: 2, kind: output, shape index: {0}]
  %s3 = inlined_call_operand.vmem [shape: f32[2,8,1], index: 3, kind: output, shape index: {1}]
  %4 = xla_tuple %s2, %s3
  %s5 = sld [smem:[#allocation0]]
  $region98: #{tpu_custom_call.1} parent=0
    _
  %s7 = ssub.s32 1, %s5
  %s8 = scalar_select 0, %s7, %s5
  $region1: #{tpu_custom_call.1} parent=0
    #allocation2 [shape = 'u8[524288]{0}', space=vmem, size = 0x80000, scoped, tag = 'input window, operand 0']
    #allocation3 [shape = 'u8[1048576]{0}', space=vmem, size = 0x100000, scoped, tag = 'input window, operand 1']
    #allocation4 [shape = 's32[2]{0}', space=sflag, size = 0x8, scoped, tag = 'scoped memory for tpu_custom_call.1']
    #allocation5 [shape = 's32[2]{0}', space=sflag, size = 0x8, scoped, tag = 'scoped memory for tpu_custom_call.1']
    #allocation6 [shape = 'u8[8192]{0}', space=vmem, size = 0x2000, scoped, tag = 'output window, operand 0']
    %9 = vsyncpa [#allocation4], 0
    %s10 = scalar_lea.sflag [#allocation4], 1
    %11 = vsyncpa %s10, 0
    %12 = vsyncpa [#allocation5], 0
    %s13 = scalar_lea.sflag [#allocation5], 1
    %14 = vsyncpa %s13, 0
    loop: start=0, step=1, limit=10
    $region2: #{tpu_custom_call.1} parent=1 // loop_pre_header
      _
    $region3: #{tpu_custom_call.1} parent=1 // loop_header
      %s16 = sphi 0, %s20
      %p17 = scmp.ge.s32.totalorder %s16, 10
      %s23 = sphi 0, %s35
      %s24 = sphi 0, %s31
      %s25 = sphi 0, %s23
      %s26 = sphi 0, %s24
      %s27 = sphi 0, %s25
      %s28 = sphi 0, %s26
      %s38 = sphi 0, %s40
      %s41 = sphi 0, %s38
      %s42 = sphi 0, %s41
      %s58 = sphi 0, %s42
      %s66 = sphi 0, %s68
      %s69 = sphi 0, %s66
      %s70 = sphi 0, %s69
      %s86 = sphi 0, %s70
      %s92 = sphi 0, %s94
      %s95 = sphi 0, %s92
      %s96 = sphi 0, %s95
      %s112 = sphi 0, %s96
      %s118 = sphi 0, %s120
      %s121 = sphi 0, %s118
      %s122 = sphi 0, %s121
      %s138 = sphi 0, %s122
    $region4: #{tpu_custom_call.1} parent=1 // loop_header_branch
      %19 = sbr.rel (%p17) target = $region8
    $region5: #{tpu_custom_call.1} parent=1 // loop_body
      %s21 = ssub.s32 %s16, 1
      %s22 = ssub.s32 %s16, 2
      %s29 = sadd.s32 1, %s24
      %p30 = scmp.ge.s32.totalorder %s29, 4
      %s31 = scalar_select %p30, 0, %s29
      %s32 = sadd.s32 1, %s23
      %s33 = scalar_select %p30, %s32, %s23
      %p34 = scmp.ge.s32.totalorder %s33, 2
      %s35 = scalar_select %p34, 0, %s33
      %s36 = ssub.s32 %s24, %s31
      %p37 = scmp.eq.s32.totalorder %s36, 0
      %s39 = sadd.s32 %s38, 1
      %s40 = scalar_select %p37, %s38, %s39
      %p43 = pneg %p37
      %p44 = scmp.eq.s32.totalorder %s16, 7
      %p45 = por %p43, %p44
      %p46 = scmp.ne.s32.totalorder %s38, %s41
      %p47 = scmp.eq.s32.totalorder %s16, 0
      %p48 = por %p46, %p47
      %p49 = scmp.ne.s32.totalorder %s38, %s41
      %p50 = scmp.eq.s32.totalorder %s21, 7
      %p51 = por %p49, %p50
      %p52 = scmp.ne.s32.totalorder %s41, %s42
      %p53 = scmp.eq.s32.totalorder %s21, 0
      %p54 = por %p52, %p53
      %p55 = scmp.ne.s32.totalorder %s41, %s42
      %p56 = scmp.eq.s32.totalorder %s22, 7
      %p57 = por %p55, %p56
      %p59 = scmp.ne.s32.totalorder %s42, %s58
      %p60 = scmp.eq.s32.totalorder %s22, 0
      %p61 = por %p59, %p60
      %s62 = ssub.s32 %s24, %s31
      %s63 = ssub.s32 %s23, %s35
      %s64 = sor.u32 %s62, %s63
      %p65 = scmp.eq.s32.totalorder %s64, 0
      %s67 = sadd.s32 %s66, 1
      %s68 = scalar_select %p65, %s66, %s67
      %p71 = pneg %p65
      %p72 = scmp.eq.s32.totalorder %s16, 7
      %p73 = por %p71, %p72
      %p74 = scmp.ne.s32.totalorder %s66, %s69
      %p75 = scmp.eq.s32.totalorder %s16, 0
      %p76 = por %p74, %p75
      %p77 = scmp.ne.s32.totalorder %s66, %s69
      %p78 = scmp.eq.s32.totalorder %s21, 7
      %p79 = por %p77, %p78
      %p80 = scmp.ne.s32.totalorder %s69, %s70
      %p81 = scmp.eq.s32.totalorder %s21, 0
      %p82 = por %p80, %p81
      %p83 = scmp.ne.s32.totalorder %s69, %s70
      %p84 = scmp.eq.s32.totalorder %s22, 7
      %p85 = por %p83, %p84
      %p87 = scmp.ne.s32.totalorder %s70, %s86
      %p88 = scmp.eq.s32.totalorder %s22, 0
      %p89 = por %p87, %p88
      %s90 = ssub.s32 %s23, %s35
      %p91 = scmp.eq.s32.totalorder %s90, 0
      %s93 = sadd.s32 %s92, 1
      %s94 = scalar_select %p91, %s92, %s93
      %p97 = pneg %p91
      %p98 = scmp.eq.s32.totalorder %s16, 7
      %p99 = por %p97, %p98
      %p100 = scmp.ne.s32.totalorder %s92, %s95
      %p101 = scmp.eq.s32.totalorder %s16, 0
      %p102 = por %p100, %p101
      %p103 = scmp.ne.s32.totalorder %s92, %s95
      %p104 = scmp.eq.s32.totalorder %s21, 7
      %p105 = por %p103, %p104
      %p106 = scmp.ne.s32.totalorder %s95, %s96
      %p107 = scmp.eq.s32.totalorder %s21, 0
      %p108 = por %p106, %p107
      %p109 = scmp.ne.s32.totalorder %s95, %s96
      %p110 = scmp.eq.s32.totalorder %s22, 7
      %p111 = por %p109, %p110
      %p113 = scmp.ne.s32.totalorder %s96, %s112
      %p114 = scmp.eq.s32.totalorder %s22, 0
      %p115 = por %p113, %p114
      %s116 = ssub.s32 %s23, %s35
      %p117 = scmp.eq.s32.totalorder %s116, 0
      %s119 = sadd.s32 %s118, 1
      %s120 = scalar_select %p117, %s118, %s119
      %p123 = pneg %p117
      %p124 = scmp.eq.s32.totalorder %s16, 7
      %p125 = por %p123, %p124
      %p126 = scmp.ne.s32.totalorder %s118, %s121
      %p127 = scmp.eq.s32.totalorder %s16, 0
      %p128 = por %p126, %p127
      %p129 = scmp.ne.s32.totalorder %s118, %s121
      %p130 = scmp.eq.s32.totalorder %s21, 7
      %p131 = por %p129, %p130
      %p132 = scmp.ne.s32.totalorder %s121, %s122
      %p133 = scmp.eq.s32.totalorder %s21, 0
      %p134 = por %p132, %p133
      %p135 = scmp.ne.s32.totalorder %s121, %s122
      %p136 = scmp.eq.s32.totalorder %s22, 7
      %p137 = por %p135, %p136
      %p139 = scmp.ne.s32.totalorder %s122, %s138
      %p140 = scmp.eq.s32.totalorder %s22, 0
      %p141 = por %p139, %p140
      %p142 = scmp.le.s32.totalorder 1, %s16
      %p143 = scmp.lt.s32.totalorder %s16, 9
      %p144 = pnand %p142, %p143
      %p145 = pneg %p144
      // Predicated region
      $region9: #{tpu_custom_call.1} parent=5 // pred_check
        _
      $region10: #{tpu_custom_call.1} parent=5 // pred_check_branch
        %147 = sbr.rel (%p144) target = $region12
      $region11: #{tpu_custom_call.1} parent=5 // pred_region
        %s148 = ssub.s32 %s16, 1
      $region12: #{tpu_custom_call.1} parent=5 // pred_fallthru
        _
      %p149 = scmp.lt.s32.totalorder %s16, 8
      // Predicated region
      $region13: #{tpu_custom_call.1} parent=5 // pred_check
        %p150 = pneg %p149
      $region14: #{tpu_custom_call.1} parent=5 // pred_check_branch
        %152 = sbr.rel (%p150) target = $region16
      $region15: #{tpu_custom_call.1} parent=5 // pred_region
        // Predicated region
        $region17: #{tpu_custom_call.1} parent=15 // pred_check
          %p153 = pneg %p48
        $region18: #{tpu_custom_call.1} parent=15 // pred_check_branch
          %155 = sbr.rel (%p153) target = $region20
        $region19: #{tpu_custom_call.1} parent=15 // pred_region
          %s156 = sand.u32 %s38, 1
          %s157 = sand.u32 %s38, 1
          %s158 = smul.addr %s157, 512
          %s159 = scalar_lea.vmem [#allocation2], %s158
          %s160 = smul.u32 16, %s24
          %s161 = smul.addr %s160, 4
          %s162 = scalar_lea.vmem %s0, %s161
          // Predicated region
          $region21: #{tpu_custom_call.1} parent=19 // pred_check
            _
          $region22: #{tpu_custom_call.1} parent=19 // pred_check_branch
            %164 = sbr.rel (0) target = $region24
          $region23: #{tpu_custom_call.1} parent=19 // pred_region
            // Predicated region
            $region25: #{tpu_custom_call.1} parent=23 // pred_check
              _
            $region26: #{tpu_custom_call.1} parent=23 // pred_check_branch
              %166 = sbr.rel target = $region28
            $region27: #{tpu_custom_call.1} parent=23 // pred_region
              // Predicated region
              $region40: #{tpu_custom_call.1} parent=27 // pred_check
                _
              $region41: #{tpu_custom_call.1} parent=27 // pred_check_branch
                %435 = sbr.rel (0) target = $region43
              $region42: #{tpu_custom_call.1} parent=27 // pred_region
                loop: start=0, step=1, limit=1
                $region44: #{tpu_custom_call.1} parent=42 // loop_pre_header
                  _
                $region45: #{tpu_custom_call.1} parent=42 // loop_header
                  %s437 = sphi 0, %s441
                  %p438 = scmp.ge.s32.totalorder %s437, 1
                  %s442 = sphi %s162, %s162
                  %s443 = sphi %s159, %s159
                $region46: #{tpu_custom_call.1} parent=42 // loop_header_branch
                  %440 = sbr.rel (%p438) target = $region50
                $region47: #{tpu_custom_call.1} parent=42 // loop_body
                  _
                $region48: #{tpu_custom_call.1} parent=42 // loop_footer
                  %s441 = sadd.s32 1, %s437
                $region49: #{tpu_custom_call.1} parent=42 // loop_footer_branch
                  %436 = sbr.rel target = $region45
                $region50: #{tpu_custom_call.1} parent=42 // loop_exit
                  _
                loop: start=0, step=1, limit=1
                $region51: #{tpu_custom_call.1} parent=42 // loop_pre_header
                  _
                $region52: #{tpu_custom_call.1} parent=42 // loop_header
                  %s446 = sphi 0, %s450
                  %p447 = scmp.ge.s32.totalorder %s446, 1
                  %s451 = sphi %s162, %s162
                  %s452 = sphi %s159, %s159
                $region53: #{tpu_custom_call.1} parent=42 // loop_header_branch
                  %449 = sbr.rel (%p447) target = $region57
                $region54: #{tpu_custom_call.1} parent=42 // loop_body
                  %v453 = vld [vmem:[%s451] sm:$0xf]
                  %454 = vst [vmem:[%s452] sm:$0xf] %v453
                  %v455 = vld [vmem:[%s451 + $0x4] sm:$0xf]
                  %456 = vst [vmem:[%s452 + $0x4] sm:$0xf] %v455
                  %v457 = vld [vmem:[%s451 + $0x8] sm:$0xf]
                  %458 = vst [vmem:[%s452 + $0x8] sm:$0xf] %v457
                  %v459 = vld [vmem:[%s451 + $0xc] sm:$0xf]
                  %460 = vst [vmem:[%s452 + $0xc] sm:$0xf] %v459
                  %v461 = vld [vmem:[%s451 + $0x10] sm:$0xf]
                  %462 = vst [vmem:[%s452 + $0x10] sm:$0xf] %v461
                  %v463 = vld [vmem:[%s451 + $0x14] sm:$0xf]
                  %464 = vst [vmem:[%s452 + $0x14] sm:$0xf] %v463
                  %v465 = vld [vmem:[%s451 + $0x18] sm:$0xf]
                  %466 = vst [vmem:[%s452 + $0x18] sm:$0xf] %v465
                  %v467 = vld [vmem:[%s451 + $0x1c] sm:$0xf]
                  %468 = vst [vmem:[%s452 + $0x1c] sm:$0xf] %v467
                  %v469 = vld [vmem:[%s451 + $0x20] sm:$0xf]
                  %470 = vst [vmem:[%s452 + $0x20] sm:$0xf] %v469
                  %v471 = vld [vmem:[%s451 + $0x24] sm:$0xf]
                  %472 = vst [vmem:[%s452 + $0x24] sm:$0xf] %v471
                  %v473 = vld [vmem:[%s451 + $0x28] sm:$0xf]
                  %474 = vst [vmem:[%s452 + $0x28] sm:$0xf] %v473
                  %v475 = vld [vmem:[%s451 + $0x2c] sm:$0xf]
                  %476 = vst [vmem:[%s452 + $0x2c] sm:$0xf] %v475
                  %v477 = vld [vmem:[%s451 + $0x30] sm:$0xf]
                  %478 = vst [vmem:[%s452 + $0x30] sm:$0xf] %v477
                  %v479 = vld [vmem:[%s451 + $0x34] sm:$0xf]
                  %480 = vst [vmem:[%s452 + $0x34] sm:$0xf] %v479
                  %v481 = vld [vmem:[%s451 + $0x38] sm:$0xf]
                  %482 = vst [vmem:[%s452 + $0x38] sm:$0xf] %v481
                  %v483 = vld [vmem:[%s451 + $0x3c] sm:$0xf]
                  %484 = vst [vmem:[%s452 + $0x3c] sm:$0xf] %v483
                  %v485 = vld [vmem:[%s451 + $0x100] sm:$0xf]
                  %486 = vst [vmem:[%s452 + $0x40] sm:$0xf] %v485
                  %v487 = vld [vmem:[%s451 + $0x104] sm:$0xf]
                  %488 = vst [vmem:[%s452 + $0x44] sm:$0xf] %v487
                  %v489 = vld [vmem:[%s451 + $0x108] sm:$0xf]
                  %490 = vst [vmem:[%s452 + $0x48] sm:$0xf] %v489
                  %v491 = vld [vmem:[%s451 + $0x10c] sm:$0xf]
                  %492 = vst [vmem:[%s452 + $0x4c] sm:$0xf] %v491
                  %v493 = vld [vmem:[%s451 + $0x110] sm:$0xf]
                  %494 = vst [vmem:[%s452 + $0x50] sm:$0xf] %v493
                  %v495 = vld [vmem:[%s451 + $0x114] sm:$0xf]
                  %496 = vst [vmem:[%s452 + $0x54] sm:$0xf] %v495
                  %v497 = vld [vmem:[%s451 + $0x118] sm:$0xf]
                  %498 = vst [vmem:[%s452 + $0x58] sm:$0xf] %v497
                  %v499 = vld [vmem:[%s451 + $0x11c] sm:$0xf]
                  %500 = vst [vmem:[%s452 + $0x5c] sm:$0xf] %v499
                  %v501 = vld [vmem:[%s451 + $0x120] sm:$0xf]
                  %502 = vst [vmem:[%s452 + $0x60] sm:$0xf] %v501
                  %v503 = vld [vmem:[%s451 + $0x124] sm:$0xf]
                  %504 = vst [vmem:[%s452 + $0x64] sm:$0xf] %v503
                  %v505 = vld [vmem:[%s451 + $0x128] sm:$0xf]
                  %506 = vst [vmem:[%s452 + $0x68] sm:$0xf] %v505
                  %v507 = vld [vmem:[%s451 + $0x12c] sm:$0xf]
                  %508 = vst [vmem:[%s452 + $0x6c] sm:$0xf] %v507
                  %v509 = vld [vmem:[%s451 + $0x130] sm:$0xf]
                  %510 = vst [vmem:[%s452 + $0x70] sm:$0xf] %v509
                  %v511 = vld [vmem:[%s451 + $0x134] sm:$0xf]
                  %512 = vst [vmem:[%s452 + $0x74] sm:$0xf] %v511
                  %v513 = vld [vmem:[%s451 + $0x138] sm:$0xf]
                  %514 = vst [vmem:[%s452 + $0x78] sm:$0xf] %v513
                  %v515 = vld [vmem:[%s451 + $0x13c] sm:$0xf]
                  %516 = vst [vmem:[%s452 + $0x7c] sm:$0xf] %v515
                  %v517 = vld [vmem:[%s451 + $0x200] sm:$0xf]
                  %518 = vst [vmem:[%s452 + $0x80] sm:$0xf] %v517
                  %v519 = vld [vmem:[%s451 + $0x204] sm:$0xf]
                  %520 = vst [vmem:[%s452 + $0x84] sm:$0xf] %v519
                  %v521 = vld [vmem:[%s451 + $0x208] sm:$0xf]
                  %522 = vst [vmem:[%s452 + $0x88] sm:$0xf] %v521
                  %v523 = vld [vmem:[%s451 + $0x20c] sm:$0xf]
                  %524 = vst [vmem:[%s452 + $0x8c] sm:$0xf] %v523
                  %v525 = vld [vmem:[%s451 + $0x210] sm:$0xf]
                  %526 = vst [vmem:[%s452 + $0x90] sm:$0xf] %v525
                  %v527 = vld [vmem:[%s451 + $0x214] sm:$0xf]
                  %528 = vst [vmem:[%s452 + $0x94] sm:$0xf] %v527
                  %v529 = vld [vmem:[%s451 + $0x218] sm:$0xf]
                  %530 = vst [vmem:[%s452 + $0x98] sm:$0xf] %v529
                  %v531 = vld [vmem:[%s451 + $0x21c] sm:$0xf]
                  %532 = vst [vmem:[%s452 + $0x9c] sm:$0xf] %v531
                  %v533 = vld [vmem:[%s451 + $0x220] sm:$0xf]
                  %534 = vst [vmem:[%s452 + $0xa0] sm:$0xf] %v533
                  %v535 = vld [vmem:[%s451 + $0x224] sm:$0xf]
                  %536 = vst [vmem:[%s452 + $0xa4] sm:$0xf] %v535
                  %v537 = vld [vmem:[%s451 + $0x228] sm:$0xf]
                  %538 = vst [vmem:[%s452 + $0xa8] sm:$0xf] %v537
                  %v539 = vld [vmem:[%s451 + $0x22c] sm:$0xf]
                  %540 = vst [vmem:[%s452 + $0xac] sm:$0xf] %v539
                  %v541 = vld [vmem:[%s451 + $0x230] sm:$0xf]
                  %542 = vst [vmem:[%s452 + $0xb0] sm:$0xf] %v541
                  %v543 = vld [vmem:[%s451 + $0x234] sm:$0xf]
                  %544 = vst [vmem:[%s452 + $0xb4] sm:$0xf] %v543
                  %v545 = vld [vmem:[%s451 + $0x238] sm:$0xf]
                  %546 = vst [vmem:[%s452 + $0xb8] sm:$0xf] %v545
                  %v547 = vld [vmem:[%s451 + $0x23c] sm:$0xf]
                  %548 = vst [vmem:[%s452 + $0xbc] sm:$0xf] %v547
                  %v549 = vld [vmem:[%s451 + $0x300] sm:$0xf]
                  %550 = vst [vmem:[%s452 + $0xc0] sm:$0xf] %v549
                  %v551 = vld [vmem:[%s451 + $0x304] sm:$0xf]
                  %552 = vst [vmem:[%s452 + $0xc4] sm:$0xf] %v551
                  %v553 = vld [vmem:[%s451 + $0x308] sm:$0xf]
                  %554 = vst [vmem:[%s452 + $0xc8] sm:$0xf] %v553
                  %v555 = vld [vmem:[%s451 + $0x30c] sm:$0xf]
                  %556 = vst [vmem:[%s452 + $0xcc] sm:$0xf] %v555
                  %v557 = vld [vmem:[%s451 + $0x310] sm:$0xf]
                  %558 = vst [vmem:[%s452 + $0xd0] sm:$0xf] %v557
                  %v559 = vld [vmem:[%s451 + $0x314] sm:$0xf]
                  %560 = vst [vmem:[%s452 + $0xd4] sm:$0xf] %v559
                  %v561 = vld [vmem:[%s451 + $0x318] sm:$0xf]
                  %562 = vst [vmem:[%s452 + $0xd8] sm:$0xf] %v561
                  %v563 = vld [vmem:[%s451 + $0x31c] sm:$0xf]
                  %564 = vst [vmem:[%s452 + $0xdc] sm:$0xf] %v563
                  %v565 = vld [vmem:[%s451 + $0x320] sm:$0xf]
                  %566 = vst [vmem:[%s452 + $0xe0] sm:$0xf] %v565
                  %v567 = vld [vmem:[%s451 + $0x324] sm:$0xf]
                  %568 = vst [vmem:[%s452 + $0xe4] sm:$0xf] %v567
                  %v569 = vld [vmem:[%s451 + $0x328] sm:$0xf]
                  %570 = vst [vmem:[%s452 + $0xe8] sm:$0xf] %v569
                  %v571 = vld [vmem:[%s451 + $0x32c] sm:$0xf]
                  %572 = vst [vmem:[%s452 + $0xec] sm:$0xf] %v571
                  %v573 = vld [vmem:[%s451 + $0x330] sm:$0xf]
                  %574 = vst [vmem:[%s452 + $0xf0] sm:$0xf] %v573
                  %v575 = vld [vmem:[%s451 + $0x334] sm:$0xf]
                  %576 = vst [vmem:[%s452 + $0xf4] sm:$0xf] %v575
                  %v577 = vld [vmem:[%s451 + $0x338] sm:$0xf]
                  %578 = vst [vmem:[%s452 + $0xf8] sm:$0xf] %v577
                  %v579 = vld [vmem:[%s451 + $0x33c] sm:$0xf]
                  %580 = vst [vmem:[%s452 + $0xfc] sm:$0xf] %v579
                  %v581 = vld [vmem:[%s451 + $0x400] sm:$0xf]
                  %582 = vst [vmem:[%s452 + $0x100] sm:$0xf] %v581
                  %v583 = vld [vmem:[%s451 + $0x404] sm:$0xf]
                  %584 = vst [vmem:[%s452 + $0x104] sm:$0xf] %v583
                  %v585 = vld [vmem:[%s451 + $0x408] sm:$0xf]
                  %586 = vst [vmem:[%s452 + $0x108] sm:$0xf] %v585
                  %v587 = vld [vmem:[%s451 + $0x40c] sm:$0xf]
                  %588 = vst [vmem:[%s452 + $0x10c] sm:$0xf] %v587
                  %v589 = vld [vmem:[%s451 + $0x410] sm:$0xf]
                  %590 = vst [vmem:[%s452 + $0x110] sm:$0xf] %v589
                  %v591 = vld [vmem:[%s451 + $0x414] sm:$0xf]
                  %592 = vst [vmem:[%s452 + $0x114] sm:$0xf] %v591
                  %v593 = vld [vmem:[%s451 + $0x418] sm:$0xf]
                  %594 = vst [vmem:[%s452 + $0x118] sm:$0xf] %v593
                  %v595 = vld [vmem:[%s451 + $0x41c] sm:$0xf]
                  %596 = vst [vmem:[%s452 + $0x11c] sm:$0xf] %v595
                  %v597 = vld [vmem:[%s451 + $0x420] sm:$0xf]
                  %598 = vst [vmem:[%s452 + $0x120] sm:$0xf] %v597
                  %v599 = vld [vmem:[%s451 + $0x424] sm:$0xf]
                  %600 = vst [vmem:[%s452 + $0x124] sm:$0xf] %v599
                  %v601 = vld [vmem:[%s451 + $0x428] sm:$0xf]
                  %602 = vst [vmem:[%s452 + $0x128] sm:$0xf] %v601
                  %v603 = vld [vmem:[%s451 + $0x42c] sm:$0xf]
                  %604 = vst [vmem:[%s452 + $0x12c] sm:$0xf] %v603
                  %v605 = vld [vmem:[%s451 + $0x430] sm:$0xf]
                  %606 = vst [vmem:[%s452 + $0x130] sm:$0xf] %v605
                  %v607 = vld [vmem:[%s451 + $0x434] sm:$0xf]
                  %608 = vst [vmem:[%s452 + $0x134] sm:$0xf] %v607
                  %v609 = vld [vmem:[%s451 + $0x438] sm:$0xf]
                  %610 = vst [vmem:[%s452 + $0x138] sm:$0xf] %v609
                  %v611 = vld [vmem:[%s451 + $0x43c] sm:$0xf]
                  %612 = vst [vmem:[%s452 + $0x13c] sm:$0xf] %v611
                  %v613 = vld [vmem:[%s451 + $0x500] sm:$0xf]
                  %614 = vst [vmem:[%s452 + $0x140] sm:$0xf] %v613
                  %v615 = vld [vmem:[%s451 + $0x504] sm:$0xf]
                  %616 = vst [vmem:[%s452 + $0x144] sm:$0xf] %v615
                  %v617 = vld [vmem:[%s451 + $0x508] sm:$0xf]
                  %618 = vst [vmem:[%s452 + $0x148] sm:$0xf] %v617
                  %v619 = vld [vmem:[%s451 + $0x50c] sm:$0xf]
                  %620 = vst [vmem:[%s452 + $0x14c] sm:$0xf] %v619
                  %v621 = vld [vmem:[%s451 + $0x510] sm:$0xf]
                  %622 = vst [vmem:[%s452 + $0x150] sm:$0xf] %v621
                  %v623 = vld [vmem:[%s451 + $0x514] sm:$0xf]
                  %624 = vst [vmem:[%s452 + $0x154] sm:$0xf] %v623
                  %v625 = vld [vmem:[%s451 + $0x518] sm:$0xf]
                  %626 = vst [vmem:[%s452 + $0x158] sm:$0xf] %v625
                  %v627 = vld [vmem:[%s451 + $0x51c] sm:$0xf]
                  %628 = vst [vmem:[%s452 + $0x15c] sm:$0xf] %v627
                  %v629 = vld [vmem:[%s451 + $0x520] sm:$0xf]
                  %630 = vst [vmem:[%s452 + $0x160] sm:$0xf] %v629
                  %v631 = vld [vmem:[%s451 + $0x524] sm:$0xf]
                  %632 = vst [vmem:[%s452 + $0x164] sm:$0xf] %v631
                  %v633 = vld [vmem:[%s451 + $0x528] sm:$0xf]
                  %634 = vst [vmem:[%s452 + $0x168] sm:$0xf] %v633
                  %v635 = vld [vmem:[%s451 + $0x52c] sm:$0xf]
                  %636 = vst [vmem:[%s452 + $0x16c] sm:$0xf] %v635
                  %v637 = vld [vmem:[%s451 + $0x530] sm:$0xf]
                  %638 = vst [vmem:[%s452 + $0x170] sm:$0xf] %v637
                  %v639 = vld [vmem:[%s451 + $0x534] sm:$0xf]
                  %640 = vst [vmem:[%s452 + $0x174] sm:$0xf] %v639
                  %v641 = vld [vmem:[%s451 + $0x538] sm:$0xf]
                  %642 = vst [vmem:[%s452 + $0x178] sm:$0xf] %v641
                  %v643 = vld [vmem:[%s451 + $0x53c] sm:$0xf]
                  %644 = vst [vmem:[%s452 + $0x17c] sm:$0xf] %v643
                  %v645 = vld [vmem:[%s451 + $0x600] sm:$0xf]
                  %646 = vst [vmem:[%s452 + $0x180] sm:$0xf] %v645
                  %v647 = vld [vmem:[%s451 + $0x604] sm:$0xf]
                  %648 = vst [vmem:[%s452 + $0x184] sm:$0xf] %v647
                  %v649 = vld [vmem:[%s451 + $0x608] sm:$0xf]
                  %650 = vst [vmem:[%s452 + $0x188] sm:$0xf] %v649
                  %v651 = vld [vmem:[%s451 + $0x60c] sm:$0xf]
                  %652 = vst [vmem:[%s452 + $0x18c] sm:$0xf] %v651
                  %v653 = vld [vmem:[%s451 + $0x610] sm:$0xf]
                  %654 = vst [vmem:[%s452 + $0x190] sm:$0xf] %v653
                  %v655 = vld [vmem:[%s451 + $0x614] sm:$0xf]
                  %656 = vst [vmem:[%s452 + $0x194] sm:$0xf] %v655
                  %v657 = vld [vmem:[%s451 + $0x618] sm:$0xf]
                  %658 = vst [vmem:[%s452 + $0x198] sm:$0xf] %v657
                  %v659 = vld [vmem:[%s451 + $0x61c] sm:$0xf]
                  %660 = vst [vmem:[%s452 + $0x19c] sm:$0xf] %v659
                  %v661 = vld [vmem:[%s451 + $0x620] sm:$0xf]
                  %662 = vst [vmem:[%s452 + $0x1a0] sm:$0xf] %v661
                  %v663 = vld [vmem:[%s451 + $0x624] sm:$0xf]
                  %664 = vst [vmem:[%s452 + $0x1a4] sm:$0xf] %v663
                  %v665 = vld [vmem:[%s451 + $0x628] sm:$0xf]
                  %666 = vst [vmem:[%s452 + $0x1a8] sm:$0xf] %v665
                  %v667 = vld [vmem:[%s451 + $0x62c] sm:$0xf]
                  %668 = vst [vmem:[%s452 + $0x1ac] sm:$0xf] %v667
                  %v669 = vld [vmem:[%s451 + $0x630] sm:$0xf]
                  %670 = vst [vmem:[%s452 + $0x1b0] sm:$0xf] %v669
                  %v671 = vld [vmem:[%s451 + $0x634] sm:$0xf]
                  %672 = vst [vmem:[%s452 + $0x1b4] sm:$0xf] %v671
                  %v673 = vld [vmem:[%s451 + $0x638] sm:$0xf]
                  %674 = vst [vmem:[%s452 + $0x1b8] sm:$0xf] %v673
                  %v675 = vld [vmem:[%s451 + $0x63c] sm:$0xf]
                  %676 = vst [vmem:[%s452 + $0x1bc] sm:$0xf] %v675
                  %v677 = vld [vmem:[%s451 + $0x700] sm:$0xf]
                  %678 = vst [vmem:[%s452 + $0x1c0] sm:$0xf] %v677
                  %v679 = vld [vmem:[%s451 + $0x704] sm:$0xf]
                  %680 = vst [vmem:[%s452 + $0x1c4] sm:$0xf] %v679
                  %v681 = vld [vmem:[%s451 + $0x708] sm:$0xf]
                  %682 = vst [vmem:[%s452 + $0x1c8] sm:$0xf] %v681
                  %v683 = vld [vmem:[%s451 + $0x70c] sm:$0xf]
                  %684 = vst [vmem:[%s452 + $0x1cc] sm:$0xf] %v683
                  %v685 = vld [vmem:[%s451 + $0x710] sm:$0xf]
                  %686 = vst [vmem:[%s452 + $0x1d0] sm:$0xf] %v685
                  %v687 = vld [vmem:[%s451 + $0x714] sm:$0xf]
                  %688 = vst [vmem:[%s452 + $0x1d4] sm:$0xf] %v687
                  %v689 = vld [vmem:[%s451 + $0x718] sm:$0xf]
                  %690 = vst [vmem:[%s452 + $0x1d8] sm:$0xf] %v689
                  %v691 = vld [vmem:[%s451 + $0x71c] sm:$0xf]
                  %692 = vst [vmem:[%s452 + $0x1dc] sm:$0xf] %v691
                  %v693 = vld [vmem:[%s451 + $0x720] sm:$0xf]
                  %694 = vst [vmem:[%s452 + $0x1e0] sm:$0xf] %v693
                  %v695 = vld [vmem:[%s451 + $0x724] sm:$0xf]
                  %696 = vst [vmem:[%s452 + $0x1e4] sm:$0xf] %v695
                  %v697 = vld [vmem:[%s451 + $0x728] sm:$0xf]
                  %698 = vst [vmem:[%s452 + $0x1e8] sm:$0xf] %v697
                  %v699 = vld [vmem:[%s451 + $0x72c] sm:$0xf]
                  %700 = vst [vmem:[%s452 + $0x1ec] sm:$0xf] %v699
                  %v701 = vld [vmem:[%s451 + $0x730] sm:$0xf]
                  %702 = vst [vmem:[%s452 + $0x1f0] sm:$0xf] %v701
                  %v703 = vld [vmem:[%s451 + $0x734] sm:$0xf]
                  %704 = vst [vmem:[%s452 + $0x1f4] sm:$0xf] %v703
                  %v705 = vld [vmem:[%s451 + $0x738] sm:$0xf]
                  %706 = vst [vmem:[%s452 + $0x1f8] sm:$0xf] %v705
                  %v707 = vld [vmem:[%s451 + $0x73c] sm:$0xf]
                  %708 = vst [vmem:[%s452 + $0x1fc] sm:$0xf] %v707
                $region55: #{tpu_custom_call.1} parent=42 // loop_footer
                  %s450 = sadd.s32 1, %s446
                $region56: #{tpu_custom_call.1} parent=42 // loop_footer_branch
                  %445 = sbr.rel target = $region52
                $region57: #{tpu_custom_call.1} parent=42 // loop_exit
                  _
              $region43: #{tpu_custom_call.1} parent=27 // pred_fallthru
                _
            $region28: #{tpu_custom_call.1} parent=23 // pred_fallthru
              _
            // Predicated region
            $region29: #{tpu_custom_call.1} parent=23 // pred_check
              _
            $region30: #{tpu_custom_call.1} parent=23 // pred_check_branch
              %168 = sbr.rel (0) target = $region32
            $region31: #{tpu_custom_call.1} parent=23 // pred_region
              loop: start=0, step=1, limit=1
              $region33: #{tpu_custom_call.1} parent=31 // loop_pre_header
                _
              $region34: #{tpu_custom_call.1} parent=31 // loop_header
                %s171 = sphi 0, %s175
                %p172 = scmp.ge.s32.totalorder %s171, 1
                %s176 = sphi %s162, %s162
                %s177 = sphi %s159, %s159
              $region35: #{tpu_custom_call.1} parent=31 // loop_header_branch
                %174 = sbr.rel (%p172) target = $region39
              $region36: #{tpu_custom_call.1} parent=31 // loop_body
                %v178 = vld [vmem:[%s176] sm:$0xf]
                %179 = vst [vmem:[%s177] sm:$0xf] %v178
                %v180 = vld [vmem:[%s176 + $0x4] sm:$0xf]
                %181 = vst [vmem:[%s177 + $0x4] sm:$0xf] %v180
                %v182 = vld [vmem:[%s176 + $0x8] sm:$0xf]
                %183 = vst [vmem:[%s177 + $0x8] sm:$0xf] %v182
                %v184 = vld [vmem:[%s176 + $0xc] sm:$0xf]
                %185 = vst [vmem:[%s177 + $0xc] sm:$0xf] %v184
                %v186 = vld [vmem:[%s176 + $0x10] sm:$0xf]
                %187 = vst [vmem:[%s177 + $0x10] sm:$0xf] %v186
                %v188 = vld [vmem:[%s176 + $0x14] sm:$0xf]
                %189 = vst [vmem:[%s177 + $0x14] sm:$0xf] %v188
                %v190 = vld [vmem:[%s176 + $0x18] sm:$0xf]
                %191 = vst [vmem:[%s177 + $0x18] sm:$0xf] %v190
                %v192 = vld [vmem:[%s176 + $0x1c] sm:$0xf]
                %193 = vst [vmem:[%s177 + $0x1c] sm:$0xf] %v192
                %v194 = vld [vmem:[%s176 + $0x20] sm:$0xf]
                %195 = vst [vmem:[%s177 + $0x20] sm:$0xf] %v194
                %v196 = vld [vmem:[%s176 + $0x24] sm:$0xf]
                %197 = vst [vmem:[%s177 + $0x24] sm:$0xf] %v196
                %v198 = vld [vmem:[%s176 + $0x28] sm:$0xf]
                %199 = vst [vmem:[%s177 + $0x28] sm:$0xf] %v198
                %v200 = vld [vmem:[%s176 + $0x2c] sm:$0xf]
                %201 = vst [vmem:[%s177 + $0x2c] sm:$0xf] %v200
                %v202 = vld [vmem:[%s176 + $0x30] sm:$0xf]
                %203 = vst [vmem:[%s177 + $0x30] sm:$0xf] %v202
                %v204 = vld [vmem:[%s176 + $0x34] sm:$0xf]
                %205 = vst [vmem:[%s177 + $0x34] sm:$0xf] %v204
                %v206 = vld [vmem:[%s176 + $0x38] sm:$0xf]
                %207 = vst [vmem:[%s177 + $0x38] sm:$0xf] %v206
                %v208 = vld [vmem:[%s176 + $0x3c] sm:$0xf]
                %209 = vst [vmem:[%s177 + $0x3c] sm:$0xf] %v208
                %v210 = vld [vmem:[%s176 + $0x100] sm:$0xf]
                %211 = vst [vmem:[%s177 + $0x40] sm:$0xf] %v210
                %v212 = vld [vmem:[%s176 + $0x104] sm:$0xf]
                %213 = vst [vmem:[%s177 + $0x44] sm:$0xf] %v212
                %v214 = vld [vmem:[%s176 + $0x108] sm:$0xf]
                %215 = vst [vmem:[%s177 + $0x48] sm:$0xf] %v214
                %v216 = vld [vmem:[%s176 + $0x10c] sm:$0xf]
                %217 = vst [vmem:[%s177 + $0x4c] sm:$0xf] %v216
                %v218 = vld [vmem:[%s176 + $0x110] sm:$0xf]
                %219 = vst [vmem:[%s177 + $0x50] sm:$0xf] %v218
                %v220 = vld [vmem:[%s176 + $0x114] sm:$0xf]
                %221 = vst [vmem:[%s177 + $0x54] sm:$0xf] %v220
                %v222 = vld [vmem:[%s176 + $0x118] sm:$0xf]
                %223 = vst [vmem:[%s177 + $0x58] sm:$0xf] %v222
                %v224 = vld [vmem:[%s176 + $0x11c] sm:$0xf]
                %225 = vst [vmem:[%s177 + $0x5c] sm:$0xf] %v224
                %v226 = vld [vmem:[%s176 + $0x120] sm:$0xf]
                %227 = vst [vmem:[%s177 + $0x60] sm:$0xf] %v226
                %v228 = vld [vmem:[%s176 + $0x124] sm:$0xf]
                %229 = vst [vmem:[%s177 + $0x64] sm:$0xf] %v228
                %v230 = vld [vmem:[%s176 + $0x128] sm:$0xf]
                %231 = vst [vmem:[%s177 + $0x68] sm:$0xf] %v230
                %v232 = vld [vmem:[%s176 + $0x12c] sm:$0xf]
                %233 = vst [vmem:[%s177 + $0x6c] sm:$0xf] %v232
                %v234 = vld [vmem:[%s176 + $0x130] sm:$0xf]
                %235 = vst [vmem:[%s177 + $0x70] sm:$0xf] %v234
                %v236 = vld [vmem:[%s176 + $0x134] sm:$0xf]
                %237 = vst [vmem:[%s177 + $0x74] sm:$0xf] %v236
                %v238 = vld [vmem:[%s176 + $0x138] sm:$0xf]
                %239 = vst [vmem:[%s177 + $0x78] sm:$0xf] %v238
                %v240 = vld [vmem:[%s176 + $0x13c] sm:$0xf]
                %241 = vst [vmem:[%s177 + $0x7c] sm:$0xf] %v240
                %v242 = vld [vmem:[%s176 + $0x200] sm:$0xf]
                %243 = vst [vmem:[%s177 + $0x80] sm:$0xf] %v242
                %v244 = vld [vmem:[%s176 + $0x204] sm:$0xf]
                %245 = vst [vmem:[%s177 + $0x84] sm:$0xf] %v244
                %v246 = vld [vmem:[%s176 + $0x208] sm:$0xf]
                %247 = vst [vmem:[%s177 + $0x88] sm:$0xf] %v246
                %v248 = vld [vmem:[%s176 + $0x20c] sm:$0xf]
                %249 = vst [vmem:[%s177 + $0x8c] sm:$0xf] %v248
                %v250 = vld [vmem:[%s176 + $0x210] sm:$0xf]
                %251 = vst [vmem:[%s177 + $0x90] sm:$0xf] %v250
                %v252 = vld [vmem:[%s176 + $0x214] sm:$0xf]
                %253 = vst [vmem:[%s177 + $0x94] sm:$0xf] %v252
                %v254 = vld [vmem:[%s176 + $0x218] sm:$0xf]
                %255 = vst [vmem:[%s177 + $0x98] sm:$0xf] %v254
                %v256 = vld [vmem:[%s176 + $0x21c] sm:$0xf]
                %257 = vst [vmem:[%s177 + $0x9c] sm:$0xf] %v256
                %v258 = vld [vmem:[%s176 + $0x220] sm:$0xf]
                %259 = vst [vmem:[%s177 + $0xa0] sm:$0xf] %v258
                %v260 = vld [vmem:[%s176 + $0x224] sm:$0xf]
                %261 = vst [vmem:[%s177 + $0xa4] sm:$0xf] %v260
                %v262 = vld [vmem:[%s176 + $0x228] sm:$0xf]
                %263 = vst [vmem:[%s177 + $0xa8] sm:$0xf] %v262
                %v264 = vld [vmem:[%s176 + $0x22c] sm:$0xf]
                %265 = vst [vmem:[%s177 + $0xac] sm:$0xf] %v264
                %v266 = vld [vmem:[%s176 + $0x230] sm:$0xf]
                %267 = vst [vmem:[%s177 + $0xb0] sm:$0xf] %v266
                %v268 = vld [vmem:[%s176 + $0x234] sm:$0xf]
                %269 = vst [vmem:[%s177 + $0xb4] sm:$0xf] %v268
                %v270 = vld [vmem:[%s176 + $0x238] sm:$0xf]
                %271 = vst [vmem:[%s177 + $0xb8] sm:$0xf] %v270
                %v272 = vld [vmem:[%s176 + $0x23c] sm:$0xf]
                %273 = vst [vmem:[%s177 + $0xbc] sm:$0xf] %v272
                %v274 = vld [vmem:[%s176 + $0x300] sm:$0xf]
                %275 = vst [vmem:[%s177 + $0xc0] sm:$0xf] %v274
                %v276 = vld [vmem:[%s176 + $0x304] sm:$0xf]
                %277 = vst [vmem:[%s177 + $0xc4] sm:$0xf] %v276
                %v278 = vld [vmem:[%s176 + $0x308] sm:$0xf]
                %279 = vst [vmem:[%s177 + $0xc8] sm:$0xf] %v278
                %v280 = vld [vmem:[%s176 + $0x30c] sm:$0xf]
                %281 = vst [vmem:[%s177 + $0xcc] sm:$0xf] %v280
                %v282 = vld [vmem:[%s176 + $0x310] sm:$0xf]
                %283 = vst [vmem:[%s177 + $0xd0] sm:$0xf] %v282
                %v284 = vld [vmem:[%s176 + $0x314] sm:$0xf]
                %285 = vst [vmem:[%s177 + $0xd4] sm:$0xf] %v284
                %v286 = vld [vmem:[%s176 + $0x318] sm:$0xf]
                %287 = vst [vmem:[%s177 + $0xd8] sm:$0xf] %v286
                %v288 = vld [vmem:[%s176 + $0x31c] sm:$0xf]
                %289 = vst [vmem:[%s177 + $0xdc] sm:$0xf] %v288
                %v290 = vld [vmem:[%s176 + $0x320] sm:$0xf]
                %291 = vst [vmem:[%s177 + $0xe0] sm:$0xf] %v290
                %v292 = vld [vmem:[%s176 + $0x324] sm:$0xf]
                %293 = vst [vmem:[%s177 + $0xe4] sm:$0xf] %v292
                %v294 = vld [vmem:[%s176 + $0x328] sm:$0xf]
                %295 = vst [vmem:[%s177 + $0xe8] sm:$0xf] %v294
                %v296 = vld [vmem:[%s176 + $0x32c] sm:$0xf]
                %297 = vst [vmem:[%s177 + $0xec] sm:$0xf] %v296
                %v298 = vld [vmem:[%s176 + $0x330] sm:$0xf]
                %299 = vst [vmem:[%s177 + $0xf0] sm:$0xf] %v298
                %v300 = vld [vmem:[%s176 + $0x334] sm:$0xf]
                %301 = vst [vmem:[%s177 + $0xf4] sm:$0xf] %v300
                %v302 = vld [vmem:[%s176 + $0x338] sm:$0xf]
                %303 = vst [vmem:[%s177 + $0xf8] sm:$0xf] %v302
                %v304 = vld [vmem:[%s176 + $0x33c] sm:$0xf]
                %305 = vst [vmem:[%s177 + $0xfc] sm:$0xf] %v304
                %v306 = vld [vmem:[%s176 + $0x400] sm:$0xf]
                %307 = vst [vmem:[%s177 + $0x100] sm:$0xf] %v306
                %v308 = vld [vmem:[%s176 + $0x404] sm:$0xf]
                %309 = vst [vmem:[%s177 + $0x104] sm:$0xf] %v308
                %v310 = vld [vmem:[%s176 + $0x408] sm:$0xf]
                %311 = vst [vmem:[%s177 + $0x108] sm:$0xf] %v310
                %v312 = vld [vmem:[%s176 + $0x40c] sm:$0xf]
                %313 = vst [vmem:[%s177 + $0x10c] sm:$0xf] %v312
                %v314 = vld [vmem:[%s176 + $0x410] sm:$0xf]
                %315 = vst [vmem:[%s177 + $0x110] sm:$0xf] %v314
                %v316 = vld [vmem:[%s176 + $0x414] sm:$0xf]
                %317 = vst [vmem:[%s177 + $0x114] sm:$0xf] %v316
                %v318 = vld [vmem:[%s176 + $0x418] sm:$0xf]
                %319 = vst [vmem:[%s177 + $0x118] sm:$0xf] %v318
                %v320 = vld [vmem:[%s176 + $0x41c] sm:$0xf]
                %321 = vst [vmem:[%s177 + $0x11c] sm:$0xf] %v320
                %v322 = vld [vmem:[%s176 + $0x420] sm:$0xf]
                %323 = vst [vmem:[%s177 + $0x120] sm:$0xf] %v322
                %v324 = vld [vmem:[%s176 + $0x424] sm:$0xf]
                %325 = vst [vmem:[%s177 + $0x124] sm:$0xf] %v324
                %v326 = vld [vmem:[%s176 + $0x428] sm:$0xf]
                %327 = vst [vmem:[%s177 + $0x128] sm:$0xf] %v326
                %v328 = vld [vmem:[%s176 + $0x42c] sm:$0xf]
                %329 = vst [vmem:[%s177 + $0x12c] sm:$0xf] %v328
                %v330 = vld [vmem:[%s176 + $0x430] sm:$0xf]
                %331 = vst [vmem:[%s177 + $0x130] sm:$0xf] %v330
                %v332 = vld [vmem:[%s176 + $0x434] sm:$0xf]
                %333 = vst [vmem:[%s177 + $0x134] sm:$0xf] %v332
                %v334 = vld [vmem:[%s176 + $0x438] sm:$0xf]
                %335 = vst [vmem:[%s177 + $0x138] sm:$0xf] %v334
                %v336 = vld [vmem:[%s176 + $0x43c] sm:$0xf]
                %337 = vst [vmem:[%s177 + $0x13c] sm:$0xf] %v336
                %v338 = vld [vmem:[%s176 + $0x500] sm:$0xf]
                %339 = vst [vmem:[%s177 + $0x140] sm:$0xf] %v338
                %v340 = vld [vmem:[%s176 + $0x504] sm:$0xf]
                %341 = vst [vmem:[%s177 + $0x144] sm:$0xf] %v340
                %v342 = vld [vmem:[%s176 + $0x508] sm:$0xf]
                %343 = vst [vmem:[%s177 + $0x148] sm:$0xf] %v342
                %v344 = vld [vmem:[%s176 + $0x50c] sm:$0xf]
                %345 = vst [vmem:[%s177 + $0x14c] sm:$0xf] %v344
                %v346 = vld [vmem:[%s176 + $0x510] sm:$0xf]
                %347 = vst [vmem:[%s177 + $0x150] sm:$0xf] %v346
                %v348 = vld [vmem:[%s176 + $0x514] sm:$0xf]
                %349 = vst [vmem:[%s177 + $0x154] sm:$0xf] %v348
                %v350 = vld [vmem:[%s176 + $0x518] sm:$0xf]
                %351 = vst [vmem:[%s177 + $0x158] sm:$0xf] %v350
                %v352 = vld [vmem:[%s176 + $0x51c] sm:$0xf]
                %353 = vst [vmem:[%s177 + $0x15c] sm:$0xf] %v352
                %v354 = vld [vmem:[%s176 + $0x520] sm:$0xf]
                %355 = vst [vmem:[%s177 + $0x160] sm:$0xf] %v354
                %v356 = vld [vmem:[%s176 + $0x524] sm:$0xf]
                %357 = vst [vmem:[%s177 + $0x164] sm:$0xf] %v356
                %v358 = vld [vmem:[%s176 + $0x528] sm:$0xf]
                %359 = vst [vmem:[%s177 + $0x168] sm:$0xf] %v358
                %v360 = vld [vmem:[%s176 + $0x52c] sm:$0xf]
                %361 = vst [vmem:[%s177 + $0x16c] sm:$0xf] %v360
                %v362 = vld [vmem:[%s176 + $0x530] sm:$0xf]
                %363 = vst [vmem:[%s177 + $0x170] sm:$0xf] %v362
                %v364 = vld [vmem:[%s176 + $0x534] sm:$0xf]
                %365 = vst [vmem:[%s177 + $0x174] sm:$0xf] %v364
                %v366 = vld [vmem:[%s176 + $0x538] sm:$0xf]
                %367 = vst [vmem:[%s177 + $0x178] sm:$0xf] %v366
                %v368 = vld [vmem:[%s176 + $0x53c] sm:$0xf]
                %369 = vst [vmem:[%s177 + $0x17c] sm:$0xf] %v368
                %v370 = vld [vmem:[%s176 + $0x600] sm:$0xf]
                %371 = vst [vmem:[%s177 + $0x180] sm:$0xf] %v370
                %v372 = vld [vmem:[%s176 + $0x604] sm:$0xf]
                %373 = vst [vmem:[%s177 + $0x184] sm:$0xf] %v372
                %v374 = vld [vmem:[%s176 + $0x608] sm:$0xf]
                %375 = vst [vmem:[%s177 + $0x188] sm:$0xf] %v374
                %v376 = vld [vmem:[%s176 + $0x60c] sm:$0xf]
                %377 = vst [vmem:[%s177 + $0x18c] sm:$0xf] %v376
                %v378 = vld [vmem:[%s176 + $0x610] sm:$0xf]
                %379 = vst [vmem:[%s177 + $0x190] sm:$0xf] %v378
                %v380 = vld [vmem:[%s176 + $0x614] sm:$0xf]
                %381 = vst [vmem:[%s177 + $0x194] sm:$0xf] %v380
                %v382 = vld [vmem:[%s176 + $0x618] sm:$0xf]
                %383 = vst [vmem:[%s177 + $0x198] sm:$0xf] %v382
                %v384 = vld [vmem:[%s176 + $0x61c] sm:$0xf]
                %385 = vst [vmem:[%s177 + $0x19c] sm:$0xf] %v384
                %v386 = vld [vmem:[%s176 + $0x620] sm:$0xf]
                %387 = vst [vmem:[%s177 + $0x1a0] sm:$0xf] %v386
                %v388 = vld [vmem:[%s176 + $0x624] sm:$0xf]
                %389 = vst [vmem:[%s177 + $0x1a4] sm:$0xf] %v388
                %v390 = vld [vmem:[%s176 + $0x628] sm:$0xf]
                %391 = vst [vmem:[%s177 + $0x1a8] sm:$0xf] %v390
                %v392 = vld [vmem:[%s176 + $0x62c] sm:$0xf]
                %393 = vst [vmem:[%s177 + $0x1ac] sm:$0xf] %v392
                %v394 = vld [vmem:[%s176 + $0x630] sm:$0xf]
                %395 = vst [vmem:[%s177 + $0x1b0] sm:$0xf] %v394
                %v396 = vld [vmem:[%s176 + $0x634] sm:$0xf]
                %397 = vst [vmem:[%s177 + $0x1b4] sm:$0xf] %v396
                %v398 = vld [vmem:[%s176 + $0x638] sm:$0xf]
                %399 = vst [vmem:[%s177 + $0x1b8] sm:$0xf] %v398
                %v400 = vld [vmem:[%s176 + $0x63c] sm:$0xf]
                %401 = vst [vmem:[%s177 + $0x1bc] sm:$0xf] %v400
                %v402 = vld [vmem:[%s176 + $0x700] sm:$0xf]
                %403 = vst [vmem:[%s177 + $0x1c0] sm:$0xf] %v402
                %v404 = vld [vmem:[%s176 + $0x704] sm:$0xf]
                %405 = vst [vmem:[%s177 + $0x1c4] sm:$0xf] %v404
                %v406 = vld [vmem:[%s176 + $0x708] sm:$0xf]
                %407 = vst [vmem:[%s177 + $0x1c8] sm:$0xf] %v406
                %v408 = vld [vmem:[%s176 + $0x70c] sm:$0xf]
                %409 = vst [vmem:[%s177 + $0x1cc] sm:$0xf] %v408
                %v410 = vld [vmem:[%s176 + $0x710] sm:$0xf]
                %411 = vst [vmem:[%s177 + $0x1d0] sm:$0xf] %v410
                %v412 = vld [vmem:[%s176 + $0x714] sm:$0xf]
                %413 = vst [vmem:[%s177 + $0x1d4] sm:$0xf] %v412
                %v414 = vld [vmem:[%s176 + $0x718] sm:$0xf]
                %415 = vst [vmem:[%s177 + $0x1d8] sm:$0xf] %v414
                %v416 = vld [vmem:[%s176 + $0x71c] sm:$0xf]
                %417 = vst [vmem:[%s177 + $0x1dc] sm:$0xf] %v416
                %v418 = vld [vmem:[%s176 + $0x720] sm:$0xf]
                %419 = vst [vmem:[%s177 + $0x1e0] sm:$0xf] %v418
                %v420 = vld [vmem:[%s176 + $0x724] sm:$0xf]
                %421 = vst [vmem:[%s177 + $0x1e4] sm:$0xf] %v420
                %v422 = vld [vmem:[%s176 + $0x728] sm:$0xf]
                %423 = vst [vmem:[%s177 + $0x1e8] sm:$0xf] %v422
                %v424 = vld [vmem:[%s176 + $0x72c] sm:$0xf]
                %425 = vst [vmem:[%s177 + $0x1ec] sm:$0xf] %v424
                %v426 = vld [vmem:[%s176 + $0x730] sm:$0xf]
                %427 = vst [vmem:[%s177 + $0x1f0] sm:$0xf] %v426
                %v428 = vld [vmem:[%s176 + $0x734] sm:$0xf]
                %429 = vst [vmem:[%s177 + $0x1f4] sm:$0xf] %v428
                %v430 = vld [vmem:[%s176 + $0x738] sm:$0xf]
                %431 = vst [vmem:[%s177 + $0x1f8] sm:$0xf] %v430
                %v432 = vld [vmem:[%s176 + $0x73c] sm:$0xf]
                %433 = vst [vmem:[%s177 + $0x1fc] sm:$0xf] %v432
              $region37: #{tpu_custom_call.1} parent=31 // loop_footer
                %s175 = sadd.s32 1, %s171
              $region38: #{tpu_custom_call.1} parent=31 // loop_footer_branch
                %170 = sbr.rel target = $region34
              $region39: #{tpu_custom_call.1} parent=31 // loop_exit
                _
            $region32: #{tpu_custom_call.1} parent=23 // pred_fallthru
              _
          $region24: #{tpu_custom_call.1} parent=19 // pred_fallthru
            _
          %709 = vnop
        $region20: #{tpu_custom_call.1} parent=15 // pred_fallthru
          _
        // Predicated region
        $region58: #{tpu_custom_call.1} parent=15 // pred_check
          %p710 = pneg %p76
        $region59: #{tpu_custom_call.1} parent=15 // pred_check_branch
          %712 = sbr.rel (%p710) target = $region61
        $region60: #{tpu_custom_call.1} parent=15 // pred_region
          #allocation8 [shape = 'u32[6]{0}', space=smem, size = 0x18, scoped, tag = 'DMA stride descriptor']
          %s713 = sand.u32 %s66, 1
          %s714 = scalar_lea.sflag [#allocation4], %s713
          %s715 = sand.u32 %s66, 1
          %s716 = smul.addr %s715, 1024
          %s717 = scalar_lea.vmem [#allocation3], %s716
          %s718 = smul.u32 16, %s24
          %s720 = ssub.s32 16384, 16384
          %721 = vsyncadd %s714, %s720
          %s722 = smul.addr %s718, 2
          %s723 = sadd.s32 %s23, %s722
          %s724 = smul.addr %s723, 128
          %s725 = scalar_lea.hbm %s1, %s724
          %s727 = sshll.u32 1, 14
          %s728 = sxor.u32 4294967295, %s727
          %s730 = sld [smem:[#allocation0]]
          %s731 = sadd.s32 2, %s730
          %s733 = sshll.u32 7, 26
          %s734 = sxor.u32 4294967295, %s733
          %s735 = sand.u32 0, %s734
          %s736 = sshll.u32 %s731, 26
          %s737 = sor.u32 %s735, %s736
          %s738 = sshll.u32 %s717, 4
          %s739 = int_to_ptr.vmem [resolvable:$true] %s738
          %745 = sst [smem:[#allocation8]] 16384
          %s746 = scalar_lea.smem [#allocation8], 1
          %747 = sst [smem:[%s746]] 2048
          %s748 = scalar_lea.smem [#allocation8], 2
          %749 = sst [smem:[%s748]] 16
          %s750 = scalar_lea.smem [#allocation8], 3
          %751 = sst [smem:[%s750]] 256
          %s752 = scalar_lea.smem [#allocation8], 4
          %753 = sst [smem:[%s752]] 128
          %s754 = scalar_lea.smem [#allocation8], 5
          %755 = sst [smem:[%s754]] 8
          %757 = dma.general %s725, 16384, %s739, %s714, [#allocation7], [#allocation8], %s737, 0
        $region61: #{tpu_custom_call.1} parent=15 // pred_fallthru
          _
      $region16: #{tpu_custom_call.1} parent=5 // pred_fallthru
        _
      %p758 = scmp.le.s32.totalorder 1, %s16
      %p759 = scmp.lt.s32.totalorder %s16, 9
      %p760 = pnand %p758, %p759
      %p761 = pneg %p760
      // Predicated region
      $region62: #{tpu_custom_call.1} parent=5 // pred_check
        _
      $region63: #{tpu_custom_call.1} parent=5 // pred_check_branch
        %763 = sbr.rel (%p760) target = $region65
      $region64: #{tpu_custom_call.1} parent=5 // pred_region
        %s764 = ssub.s32 %s16, 1
        %s765 = sand.u32 %s41, 1
        %s766 = sand.u32 %s41, 1
        %s767 = smul.addr %s766, 512
        %s768 = scalar_lea.vmem [#allocation2], %s767
        // Predicated region
        $region66: #{tpu_custom_call.1} parent=64 // pred_check
          %p769 = pneg %p54
        $region67: #{tpu_custom_call.1} parent=64 // pred_check_branch
          %771 = sbr.rel (%p769) target = $region69
        $region68: #{tpu_custom_call.1} parent=64 // pred_region
          _
        $region69: #{tpu_custom_call.1} parent=64 // pred_fallthru
          _
        %s772 = sand.u32 %s69, 1
        %s773 = scalar_lea.sflag [#allocation4], %s772
        %s774 = sand.u32 %s69, 1
        %s775 = smul.addr %s774, 1024
        %s776 = scalar_lea.vmem [#allocation3], %s775
        // Predicated region
        $region70: #{tpu_custom_call.1} parent=64 // pred_check
          %p777 = pneg %p82
        $region71: #{tpu_custom_call.1} parent=64 // pred_check_branch
          %779 = sbr.rel (%p777) target = $region73
        $region72: #{tpu_custom_call.1} parent=64 // pred_region
          %780 = dma.done %s773, 16384
        $region73: #{tpu_custom_call.1} parent=64 // pred_fallthru
          _
        %s781 = sand.u32 %s41, 1
        %s782 = sand.u32 %s41, 1
        %s783 = smul.addr %s782, 512
        %s784 = scalar_lea.vmem [#allocation2], %s783
        %p785 = pneg %p54
        %p786 = pneg %p51
        %s787 = sand.u32 %s69, 1
        %s788 = scalar_lea.sflag [#allocation4], %s787
        %s789 = sand.u32 %s69, 1
        %s790 = smul.addr %s789, 1024
        %s791 = scalar_lea.vmem [#allocation3], %s790
        %p792 = pneg %p82
        %p793 = pneg %p79
        %p794 = pneg %p108
        %p795 = pneg %p105
        %s796 = sand.u32 %s95, 1
        %s797 = scalar_lea.sflag [#allocation5], %s796
        %s798 = sand.u32 %s95, 1
        %s799 = smul.addr %s798, 8
        %s800 = scalar_lea.vmem [#allocation6], %s799
        %p801 = pneg %p134
        %p802 = pneg %p131
        %p803 = scmp.lt.s32.totalorder %s25, 1
        %s804 = scalar_select %p803, %s25, 1
        %s805 = smul.addr %s804, 8
        %s806 = scalar_lea.vmem %s3, %s805
        %s807 = smul.u32 16, %s26
        %s808 = smul.u32 16, %s26
        %p809 = scmp.lt.s32.totalorder %s25, 1
        %s810 = scalar_select %p809, %s25, 1
        %s811 = smul.addr %s810, 8
        %s812 = scalar_lea.vmem %s3, %s811
        %p813 = scmp.eq.s32.totalorder %s26, 0
        // Predicated region
        $region74: #{tpu_custom_call.1} parent=64 // pred_check
          %p814 = pneg %p813
        $region75: #{tpu_custom_call.1} parent=64 // pred_check_branch
          %816 = sbr.rel (%p814) target = $region77
        $region76: #{tpu_custom_call.1} parent=64 // pred_region
          %817 = vst [vmem:[%s800] sm:$0xff] 0.0
          %vm818 = vcmask 7168
          %819 = vst.msk [vmem:[%s812] sm:$0xff] %vm818, 0.0
        $region77: #{tpu_custom_call.1} parent=64 // pred_fallthru
          _
        %v820 = vld [vmem:[%s768] sm:$0xf]
        %v821 = vld [vmem:[%s768 + $0x4] sm:$0xf]
        %v822 = vld [vmem:[%s768 + $0x8] sm:$0xf]
        %v823 = vld [vmem:[%s768 + $0xc] sm:$0xf]
        %v824 = vld [vmem:[%s768 + $0x10] sm:$0xf]
        %v825 = vld [vmem:[%s768 + $0x14] sm:$0xf]
        %v826 = vld [vmem:[%s768 + $0x18] sm:$0xf]
        %v827 = vld [vmem:[%s768 + $0x1c] sm:$0xf]
        %v828 = vld [vmem:[%s768 + $0x20] sm:$0xf]
        %v829 = vld [vmem:[%s768 + $0x24] sm:$0xf]
        %v830 = vld [vmem:[%s768 + $0x28] sm:$0xf]
        %v831 = vld [vmem:[%s768 + $0x2c] sm:$0xf]
        %v832 = vld [vmem:[%s768 + $0x30] sm:$0xf]
        %v833 = vld [vmem:[%s768 + $0x34] sm:$0xf]
        %v834 = vld [vmem:[%s768 + $0x38] sm:$0xf]
        %v835 = vld [vmem:[%s768 + $0x3c] sm:$0xf]
        %v836 = vld [vmem:[%s768 + $0x40] sm:$0xf]
        %v837 = vld [vmem:[%s768 + $0x44] sm:$0xf]
        %v838 = vld [vmem:[%s768 + $0x48] sm:$0xf]
        %v839 = vld [vmem:[%s768 + $0x4c] sm:$0xf]
        %v840 = vld [vmem:[%s768 + $0x50] sm:$0xf]
        %v841 = vld [vmem:[%s768 + $0x54] sm:$0xf]
        %v842 = vld [vmem:[%s768 + $0x58] sm:$0xf]
        %v843 = vld [vmem:[%s768 + $0x5c] sm:$0xf]
        %v844 = vld [vmem:[%s768 + $0x60] sm:$0xf]
        %v845 = vld [vmem:[%s768 + $0x64] sm:$0xf]
        %v846 = vld [vmem:[%s768 + $0x68] sm:$0xf]
        %v847 = vld [vmem:[%s768 + $0x6c] sm:$0xf]
        %v848 = vld [vmem:[%s768 + $0x70] sm:$0xf]
        %v849 = vld [vmem:[%s768 + $0x74] sm:$0xf]
        %v850 = vld [vmem:[%s768 + $0x78] sm:$0xf]
        %v851 = vld [vmem:[%s768 + $0x7c] sm:$0xf]
        %v852 = vld [vmem:[%s768 + $0x80] sm:$0xf]
        %v853 = vld [vmem:[%s768 + $0x84] sm:$0xf]
        %v854 = vld [vmem:[%s768 + $0x88] sm:$0xf]
        %v855 = vld [vmem:[%s768 + $0x8c] sm:$0xf]
        %v856 = vld [vmem:[%s768 + $0x90] sm:$0xf]
        %v857 = vld [vmem:[%s768 + $0x94] sm:$0xf]
        %v858 = vld [vmem:[%s768 + $0x98] sm:$0xf]
        %v859 = vld [vmem:[%s768 + $0x9c] sm:$0xf]
        %v860 = vld [vmem:[%s768 + $0xa0] sm:$0xf]
        %v861 = vld [vmem:[%s768 + $0xa4] sm:$0xf]
        %v862 = vld [vmem:[%s768 + $0xa8] sm:$0xf]
        %v863 = vld [vmem:[%s768 + $0xac] sm:$0xf]
        %v864 = vld [vmem:[%s768 + $0xb0] sm:$0xf]
        %v865 = vld [vmem:[%s768 + $0xb4] sm:$0xf]
        %v866 = vld [vmem:[%s768 + $0xb8] sm:$0xf]
        %v867 = vld [vmem:[%s768 + $0xbc] sm:$0xf]
        %v868 = vld [vmem:[%s768 + $0xc0] sm:$0xf]
        %v869 = vld [vmem:[%s768 + $0xc4] sm:$0xf]
        %v870 = vld [vmem:[%s768 + $0xc8] sm:$0xf]
        %v871 = vld [vmem:[%s768 + $0xcc] sm:$0xf]
        %v872 = vld [vmem:[%s768 + $0xd0] sm:$0xf]
        %v873 = vld [vmem:[%s768 + $0xd4] sm:$0xf]
        %v874 = vld [vmem:[%s768 + $0xd8] sm:$0xf]
        %v875 = vld [vmem:[%s768 + $0xdc] sm:$0xf]
        %v876 = vld [vmem:[%s768 + $0xe0] sm:$0xf]
        %v877 = vld [vmem:[%s768 + $0xe4] sm:$0xf]
        %v878 = vld [vmem:[%s768 + $0xe8] sm:$0xf]
        %v879 = vld [vmem:[%s768 + $0xec] sm:$0xf]
        %v880 = vld [vmem:[%s768 + $0xf0] sm:$0xf]
        %v881 = vld [vmem:[%s768 + $0xf4] sm:$0xf]
        %v882 = vld [vmem:[%s768 + $0xf8] sm:$0xf]
        %v883 = vld [vmem:[%s768 + $0xfc] sm:$0xf]
        %v884 = vld [vmem:[%s768 + $0x100] sm:$0xf]
        %v885 = vld [vmem:[%s768 + $0x104] sm:$0xf]
        %v886 = vld [vmem:[%s768 + $0x108] sm:$0xf]
        %v887 = vld [vmem:[%s768 + $0x10c] sm:$0xf]
        %v888 = vld [vmem:[%s768 + $0x110] sm:$0xf]
        %v889 = vld [vmem:[%s768 + $0x114] sm:$0xf]
        %v890 = vld [vmem:[%s768 + $0x118] sm:$0xf]
        %v891 = vld [vmem:[%s768 + $0x11c] sm:$0xf]
        %v892 = vld [vmem:[%s768 + $0x120] sm:$0xf]
        %v893 = vld [vmem:[%s768 + $0x124] sm:$0xf]
        %v894 = vld [vmem:[%s768 + $0x128] sm:$0xf]
        %v895 = vld [vmem:[%s768 + $0x12c] sm:$0xf]
        %v896 = vld [vmem:[%s768 + $0x130] sm:$0xf]
        %v897 = vld [vmem:[%s768 + $0x134] sm:$0xf]
        %v898 = vld [vmem:[%s768 + $0x138] sm:$0xf]
        %v899 = vld [vmem:[%s768 + $0x13c] sm:$0xf]
        %v900 = vld [vmem:[%s768 + $0x140] sm:$0xf]
        %v901 = vld [vmem:[%s768 + $0x144] sm:$0xf]
        %v902 = vld [vmem:[%s768 + $0x148] sm:$0xf]
        %v903 = vld [vmem:[%s768 + $0x14c] sm:$0xf]
        %v904 = vld [vmem:[%s768 + $0x150] sm:$0xf]
        %v905 = vld [vmem:[%s768 + $0x154] sm:$0xf]
        %v906 = vld [vmem:[%s768 + $0x158] sm:$0xf]
        %v907 = vld [vmem:[%s768 + $0x15c] sm:$0xf]
        %v908 = vld [vmem:[%s768 + $0x160] sm:$0xf]
        %v909 = vld [vmem:[%s768 + $0x164] sm:$0xf]
        %v910 = vld [vmem:[%s768 + $0x168] sm:$0xf]
        %v911 = vld [vmem:[%s768 + $0x16c] sm:$0xf]
        %v912 = vld [vmem:[%s768 + $0x170] sm:$0xf]
        %v913 = vld [vmem:[%s768 + $0x174] sm:$0xf]
        %v914 = vld [vmem:[%s768 + $0x178] sm:$0xf]
        %v915 = vld [vmem:[%s768 + $0x17c] sm:$0xf]
        %v916 = vld [vmem:[%s768 + $0x180] sm:$0xf]
        %v917 = vld [vmem:[%s768 + $0x184] sm:$0xf]
        %v918 = vld [vmem:[%s768 + $0x188] sm:$0xf]
        %v919 = vld [vmem:[%s768 + $0x18c] sm:$0xf]
        %v920 = vld [vmem:[%s768 + $0x190] sm:$0xf]
        %v921 = vld [vmem:[%s768 + $0x194] sm:$0xf]
        %v922 = vld [vmem:[%s768 + $0x198] sm:$0xf]
        %v923 = vld [vmem:[%s768 + $0x19c] sm:$0xf]
        %v924 = vld [vmem:[%s768 + $0x1a0] sm:$0xf]
        %v925 = vld [vmem:[%s768 + $0x1a4] sm:$0xf]
        %v926 = vld [vmem:[%s768 + $0x1a8] sm:$0xf]
        %v927 = vld [vmem:[%s768 + $0x1ac] sm:$0xf]
        %v928 = vld [vmem:[%s768 + $0x1b0] sm:$0xf]
        %v929 = vld [vmem:[%s768 + $0x1b4] sm:$0xf]
        %v930 = vld [vmem:[%s768 + $0x1b8] sm:$0xf]
        %v931 = vld [vmem:[%s768 + $0x1bc] sm:$0xf]
        %v932 = vld [vmem:[%s768 + $0x1c0] sm:$0xf]
        %v933 = vld [vmem:[%s768 + $0x1c4] sm:$0xf]
        %v934 = vld [vmem:[%s768 + $0x1c8] sm:$0xf]
        %v935 = vld [vmem:[%s768 + $0x1cc] sm:$0xf]
        %v936 = vld [vmem:[%s768 + $0x1d0] sm:$0xf]
        %v937 = vld [vmem:[%s768 + $0x1d4] sm:$0xf]
        %v938 = vld [vmem:[%s768 + $0x1d8] sm:$0xf]
        %v939 = vld [vmem:[%s768 + $0x1dc] sm:$0xf]
        %v940 = vld [vmem:[%s768 + $0x1e0] sm:$0xf]
        %v941 = vld [vmem:[%s768 + $0x1e4] sm:$0xf]
        %v942 = vld [vmem:[%s768 + $0x1e8] sm:$0xf]
        %v943 = vld [vmem:[%s768 + $0x1ec] sm:$0xf]
        %v944 = vld [vmem:[%s768 + $0x1f0] sm:$0xf]
        %v945 = vld [vmem:[%s768 + $0x1f4] sm:$0xf]
        %v946 = vld [vmem:[%s768 + $0x1f8] sm:$0xf]
        %v947 = vld [vmem:[%s768 + $0x1fc] sm:$0xf]
        %v948 = vunpack.c.l.bf16 %v820
        %v949 = vunpack.c.l.bf16 %v821
        %v950 = vunpack.c.l.bf16 %v822
        %v951 = vunpack.c.l.bf16 %v823
        %v952 = vunpack.c.l.bf16 %v824
        %v953 = vunpack.c.l.bf16 %v825
        %v954 = vunpack.c.l.bf16 %v826
        %v955 = vunpack.c.l.bf16 %v827
        %v956 = vunpack.c.l.bf16 %v828
        %v957 = vunpack.c.l.bf16 %v829
        %v958 = vunpack.c.l.bf16 %v830
        %v959 = vunpack.c.l.bf16 %v831
        %v960 = vunpack.c.l.bf16 %v832
        %v961 = vunpack.c.l.bf16 %v833
        %v962 = vunpack.c.l.bf16 %v834
        %v963 = vunpack.c.l.bf16 %v835
        %v964 = vunpack.c.l.bf16 %v836
        %v965 = vunpack.c.l.bf16 %v837
        %v966 = vunpack.c.l.bf16 %v838
        %v967 = vunpack.c.l.bf16 %v839
        %v968 = vunpack.c.l.bf16 %v840
        %v969 = vunpack.c.l.bf16 %v841
        %v970 = vunpack.c.l.bf16 %v842
        %v971 = vunpack.c.l.bf16 %v843
        %v972 = vunpack.c.l.bf16 %v844
        %v973 = vunpack.c.l.bf16 %v845
        %v974 = vunpack.c.l.bf16 %v846
        %v975 = vunpack.c.l.bf16 %v847
        %v976 = vunpack.c.l.bf16 %v848
        %v977 = vunpack.c.l.bf16 %v849
        %v978 = vunpack.c.l.bf16 %v850
        %v979 = vunpack.c.l.bf16 %v851
        %v980 = vunpack.c.l.bf16 %v852
        %v981 = vunpack.c.l.bf16 %v853
        %v982 = vunpack.c.l.bf16 %v854
        %v983 = vunpack.c.l.bf16 %v855
        %v984 = vunpack.c.l.bf16 %v856
        %v985 = vunpack.c.l.bf16 %v857
        %v986 = vunpack.c.l.bf16 %v858
        %v987 = vunpack.c.l.bf16 %v859
        %v988 = vunpack.c.l.bf16 %v860
        %v989 = vunpack.c.l.bf16 %v861
        %v990 = vunpack.c.l.bf16 %v862
        %v991 = vunpack.c.l.bf16 %v863
        %v992 = vunpack.c.l.bf16 %v864
        %v993 = vunpack.c.l.bf16 %v865
        %v994 = vunpack.c.l.bf16 %v866
        %v995 = vunpack.c.l.bf16 %v867
        %v996 = vunpack.c.l.bf16 %v868
        %v997 = vunpack.c.l.bf16 %v869
        %v998 = vunpack.c.l.bf16 %v870
        %v999 = vunpack.c.l.bf16 %v871
        %v1000 = vunpack.c.l.bf16 %v872
        %v1001 = vunpack.c.l.bf16 %v873
        %v1002 = vunpack.c.l.bf16 %v874
        %v1003 = vunpack.c.l.bf16 %v875
        %v1004 = vunpack.c.l.bf16 %v876
        %v1005 = vunpack.c.l.bf16 %v877
        %v1006 = vunpack.c.l.bf16 %v878
        %v1007 = vunpack.c.l.bf16 %v879
        %v1008 = vunpack.c.l.bf16 %v880
        %v1009 = vunpack.c.l.bf16 %v881
        %v1010 = vunpack.c.l.bf16 %v882
        %v1011 = vunpack.c.l.bf16 %v883
        %v1012 = vunpack.c.l.bf16 %v884
        %v1013 = vunpack.c.l.bf16 %v885
        %v1014 = vunpack.c.l.bf16 %v886
        %v1015 = vunpack.c.l.bf16 %v887
        %v1016 = vunpack.c.l.bf16 %v888
        %v1017 = vunpack.c.l.bf16 %v889
        %v1018 = vunpack.c.l.bf16 %v890
        %v1019 = vunpack.c.l.bf16 %v891
        %v1020 = vunpack.c.l.bf16 %v892
        %v1021 = vunpack.c.l.bf16 %v893
        %v1022 = vunpack.c.l.bf16 %v894
        %v1023 = vunpack.c.l.bf16 %v895
        %v1024 = vunpack.c.l.bf16 %v896
        %v1025 = vunpack.c.l.bf16 %v897
        %v1026 = vunpack.c.l.bf16 %v898
        %v1027 = vunpack.c.l.bf16 %v899
        %v1028 = vunpack.c.l.bf16 %v900
        %v1029 = vunpack.c.l.bf16 %v901
        %v1030 = vunpack.c.l.bf16 %v902
        %v1031 = vunpack.c.l.bf16 %v903
        %v1032 = vunpack.c.l.bf16 %v904
        %v1033 = vunpack.c.l.bf16 %v905
        %v1034 = vunpack.c.l.bf16 %v906
        %v1035 = vunpack.c.l.bf16 %v907
        %v1036 = vunpack.c.l.bf16 %v908
        %v1037 = vunpack.c.l.bf16 %v909
        %v1038 = vunpack.c.l.bf16 %v910
        %v1039 = vunpack.c.l.bf16 %v911
        %v1040 = vunpack.c.l.bf16 %v912
        %v1041 = vunpack.c.l.bf16 %v913
        %v1042 = vunpack.c.l.bf16 %v914
        %v1043 = vunpack.c.l.bf16 %v915
        %v1044 = vunpack.c.l.bf16 %v916
        %v1045 = vunpack.c.l.bf16 %v917
        %v1046 = vunpack.c.l.bf16 %v918
        %v1047 = vunpack.c.l.bf16 %v919
        %v1048 = vunpack.c.l.bf16 %v920
        %v1049 = vunpack.c.l.bf16 %v921
        %v1050 = vunpack.c.l.bf16 %v922
        %v1051 = vunpack.c.l.bf16 %v923
        %v1052 = vunpack.c.l.bf16 %v924
        %v1053 = vunpack.c.l.bf16 %v925
        %v1054 = vunpack.c.l.bf16 %v926
        %v1055 = vunpack.c.l.bf16 %v927
        %v1056 = vunpack.c.l.bf16 %v928
        %v1057 = vunpack.c.l.bf16 %v929
        %v1058 = vunpack.c.l.bf16 %v930
        %v1059 = vunpack.c.l.bf16 %v931
        %v1060 = vunpack.c.l.bf16 %v932
        %v1061 = vunpack.c.l.bf16 %v933
        %v1062 = vunpack.c.l.bf16 %v934
        %v1063 = vunpack.c.l.bf16 %v935
        %v1064 = vunpack.c.l.bf16 %v936
        %v1065 = vunpack.c.l.bf16 %v937
        %v1066 = vunpack.c.l.bf16 %v938
        %v1067 = vunpack.c.l.bf16 %v939
        %v1068 = vunpack.c.l.bf16 %v940
        %v1069 = vunpack.c.l.bf16 %v941
        %v1070 = vunpack.c.l.bf16 %v942
        %v1071 = vunpack.c.l.bf16 %v943
        %v1072 = vunpack.c.l.bf16 %v944
        %v1073 = vunpack.c.l.bf16 %v945
        %v1074 = vunpack.c.l.bf16 %v946
        %v1075 = vunpack.c.l.bf16 %v947
        %v1076 = vld [vmem:[%s776] sm:$0xff]
        %v1077 = vld [vmem:[%s776 + $0x8] sm:$0xff]
        %v1078 = vld [vmem:[%s776 + $0x10] sm:$0xff]
        %v1079 = vld [vmem:[%s776 + $0x18] sm:$0xff]
        %v1080 = vld [vmem:[%s776 + $0x20] sm:$0xff]
        %v1081 = vld [vmem:[%s776 + $0x28] sm:$0xff]
        %v1082 = vld [vmem:[%s776 + $0x30] sm:$0xff]
        %v1083 = vld [vmem:[%s776 + $0x38] sm:$0xff]
        %v1084 = vld [vmem:[%s776 + $0x40] sm:$0xff]
        %v1085 = vld [vmem:[%s776 + $0x48] sm:$0xff]
        %v1086 = vld [vmem:[%s776 + $0x50] sm:$0xff]
        %v1087 = vld [vmem:[%s776 + $0x58] sm:$0xff]
        %v1088 = vld [vmem:[%s776 + $0x60] sm:$0xff]
        %v1089 = vld [vmem:[%s776 + $0x68] sm:$0xff]
        %v1090 = vld [vmem:[%s776 + $0x70] sm:$0xff]
        %v1091 = vld [vmem:[%s776 + $0x78] sm:$0xff]
        %v1092 = vld [vmem:[%s776 + $0x80] sm:$0xff]
        %v1093 = vld [vmem:[%s776 + $0x88] sm:$0xff]
        %v1094 = vld [vmem:[%s776 + $0x90] sm:$0xff]
        %v1095 = vld [vmem:[%s776 + $0x98] sm:$0xff]
        %v1096 = vld [vmem:[%s776 + $0xa0] sm:$0xff]
        %v1097 = vld [vmem:[%s776 + $0xa8] sm:$0xff]
        %v1098 = vld [vmem:[%s776 + $0xb0] sm:$0xff]
        %v1099 = vld [vmem:[%s776 + $0xb8] sm:$0xff]
        %v1100 = vld [vmem:[%s776 + $0xc0] sm:$0xff]
        %v1101 = vld [vmem:[%s776 + $0xc8] sm:$0xff]
        %v1102 = vld [vmem:[%s776 + $0xd0] sm:$0xff]
        %v1103 = vld [vmem:[%s776 + $0xd8] sm:$0xff]
        %v1104 = vld [vmem:[%s776 + $0xe0] sm:$0xff]
        %v1105 = vld [vmem:[%s776 + $0xe8] sm:$0xff]
        %v1106 = vld [vmem:[%s776 + $0xf0] sm:$0xff]
        %v1107 = vld [vmem:[%s776 + $0xf8] sm:$0xff]
        %v1108 = vld [vmem:[%s776 + $0x100] sm:$0xff]
        %v1109 = vld [vmem:[%s776 + $0x108] sm:$0xff]
        %v1110 = vld [vmem:[%s776 + $0x110] sm:$0xff]
        %v1111 = vld [vmem:[%s776 + $0x118] sm:$0xff]
        %v1112 = vld [vmem:[%s776 + $0x120] sm:$0xff]
        %v1113 = vld [vmem:[%s776 + $0x128] sm:$0xff]
        %v1114 = vld [vmem:[%s776 + $0x130] sm:$0xff]
        %v1115 = vld [vmem:[%s776 + $0x138] sm:$0xff]
        %v1116 = vld [vmem:[%s776 + $0x140] sm:$0xff]
        %v1117 = vld [vmem:[%s776 + $0x148] sm:$0xff]
        %v1118 = vld [vmem:[%s776 + $0x150] sm:$0xff]
        %v1119 = vld [vmem:[%s776 + $0x158] sm:$0xff]
        %v1120 = vld [vmem:[%s776 + $0x160] sm:$0xff]
        %v1121 = vld [vmem:[%s776 + $0x168] sm:$0xff]
        %v1122 = vld [vmem:[%s776 + $0x170] sm:$0xff]
        %v1123 = vld [vmem:[%s776 + $0x178] sm:$0xff]
        %v1124 = vld [vmem:[%s776 + $0x180] sm:$0xff]
        %v1125 = vld [vmem:[%s776 + $0x188] sm:$0xff]
        %v1126 = vld [vmem:[%s776 + $0x190] sm:$0xff]
        %v1127 = vld [vmem:[%s776 + $0x198] sm:$0xff]
        %v1128 = vld [vmem:[%s776 + $0x1a0] sm:$0xff]
        %v1129 = vld [vmem:[%s776 + $0x1a8] sm:$0xff]
        %v1130 = vld [vmem:[%s776 + $0x1b0] sm:$0xff]
        %v1131 = vld [vmem:[%s776 + $0x1b8] sm:$0xff]
        %v1132 = vld [vmem:[%s776 + $0x1c0] sm:$0xff]
        %v1133 = vld [vmem:[%s776 + $0x1c8] sm:$0xff]
        %v1134 = vld [vmem:[%s776 + $0x1d0] sm:$0xff]
        %v1135 = vld [vmem:[%s776 + $0x1d8] sm:$0xff]
        %v1136 = vld [vmem:[%s776 + $0x1e0] sm:$0xff]
        %v1137 = vld [vmem:[%s776 + $0x1e8] sm:$0xff]
        %v1138 = vld [vmem:[%s776 + $0x1f0] sm:$0xff]
        %v1139 = vld [vmem:[%s776 + $0x1f8] sm:$0xff]
        %v1140 = vld [vmem:[%s776 + $0x200] sm:$0xff]
        %v1141 = vld [vmem:[%s776 + $0x208] sm:$0xff]
        %v1142 = vld [vmem:[%s776 + $0x210] sm:$0xff]
        %v1143 = vld [vmem:[%s776 + $0x218] sm:$0xff]
        %v1144 = vld [vmem:[%s776 + $0x220] sm:$0xff]
        %v1145 = vld [vmem:[%s776 + $0x228] sm:$0xff]
        %v1146 = vld [vmem:[%s776 + $0x230] sm:$0xff]
        %v1147 = vld [vmem:[%s776 + $0x238] sm:$0xff]
        %v1148 = vld [vmem:[%s776 + $0x240] sm:$0xff]
        %v1149 = vld [vmem:[%s776 + $0x248] sm:$0xff]
        %v1150 = vld [vmem:[%s776 + $0x250] sm:$0xff]
        %v1151 = vld [vmem:[%s776 + $0x258] sm:$0xff]
        %v1152 = vld [vmem:[%s776 + $0x260] sm:$0xff]
        %v1153 = vld [vmem:[%s776 + $0x268] sm:$0xff]
        %v1154 = vld [vmem:[%s776 + $0x270] sm:$0xff]
        %v1155 = vld [vmem:[%s776 + $0x278] sm:$0xff]
        %v1156 = vld [vmem:[%s776 + $0x280] sm:$0xff]
        %v1157 = vld [vmem:[%s776 + $0x288] sm:$0xff]
        %v1158 = vld [vmem:[%s776 + $0x290] sm:$0xff]
        %v1159 = vld [vmem:[%s776 + $0x298] sm:$0xff]
        %v1160 = vld [vmem:[%s776 + $0x2a0] sm:$0xff]
        %v1161 = vld [vmem:[%s776 + $0x2a8] sm:$0xff]
        %v1162 = vld [vmem:[%s776 + $0x2b0] sm:$0xff]
        %v1163 = vld [vmem:[%s776 + $0x2b8] sm:$0xff]
        %v1164 = vld [vmem:[%s776 + $0x2c0] sm:$0xff]
        %v1165 = vld [vmem:[%s776 + $0x2c8] sm:$0xff]
        %v1166 = vld [vmem:[%s776 + $0x2d0] sm:$0xff]
        %v1167 = vld [vmem:[%s776 + $0x2d8] sm:$0xff]
        %v1168 = vld [vmem:[%s776 + $0x2e0] sm:$0xff]
        %v1169 = vld [vmem:[%s776 + $0x2e8] sm:$0xff]
        %v1170 = vld [vmem:[%s776 + $0x2f0] sm:$0xff]
        %v1171 = vld [vmem:[%s776 + $0x2f8] sm:$0xff]
        %v1172 = vld [vmem:[%s776 + $0x300] sm:$0xff]
        %v1173 = vld [vmem:[%s776 + $0x308] sm:$0xff]
        %v1174 = vld [vmem:[%s776 + $0x310] sm:$0xff]
        %v1175 = vld [vmem:[%s776 + $0x318] sm:$0xff]
        %v1176 = vld [vmem:[%s776 + $0x320] sm:$0xff]
        %v1177 = vld [vmem:[%s776 + $0x328] sm:$0xff]
        %v1178 = vld [vmem:[%s776 + $0x330] sm:$0xff]
        %v1179 = vld [vmem:[%s776 + $0x338] sm:$0xff]
        %v1180 = vld [vmem:[%s776 + $0x340] sm:$0xff]
        %v1181 = vld [vmem:[%s776 + $0x348] sm:$0xff]
        %v1182 = vld [vmem:[%s776 + $0x350] sm:$0xff]
        %v1183 = vld [vmem:[%s776 + $0x358] sm:$0xff]
        %v1184 = vld [vmem:[%s776 + $0x360] sm:$0xff]
        %v1185 = vld [vmem:[%s776 + $0x368] sm:$0xff]
        %v1186 = vld [vmem:[%s776 + $0x370] sm:$0xff]
        %v1187 = vld [vmem:[%s776 + $0x378] sm:$0xff]
        %v1188 = vld [vmem:[%s776 + $0x380] sm:$0xff]
        %v1189 = vld [vmem:[%s776 + $0x388] sm:$0xff]
        %v1190 = vld [vmem:[%s776 + $0x390] sm:$0xff]
        %v1191 = vld [vmem:[%s776 + $0x398] sm:$0xff]
        %v1192 = vld [vmem:[%s776 + $0x3a0] sm:$0xff]
        %v1193 = vld [vmem:[%s776 + $0x3a8] sm:$0xff]
        %v1194 = vld [vmem:[%s776 + $0x3b0] sm:$0xff]
        %v1195 = vld [vmem:[%s776 + $0x3b8] sm:$0xff]
        %v1196 = vld [vmem:[%s776 + $0x3c0] sm:$0xff]
        %v1197 = vld [vmem:[%s776 + $0x3c8] sm:$0xff]
        %v1198 = vld [vmem:[%s776 + $0x3d0] sm:$0xff]
        %v1199 = vld [vmem:[%s776 + $0x3d8] sm:$0xff]
        %v1200 = vld [vmem:[%s776 + $0x3e0] sm:$0xff]
        %v1201 = vld [vmem:[%s776 + $0x3e8] sm:$0xff]
        %v1202 = vld [vmem:[%s776 + $0x3f0] sm:$0xff]
        %v1203 = vld [vmem:[%s776 + $0x3f8] sm:$0xff]
        %v1204 = vld [vmem:[%s800] sm:$0xff]
        %1206 = vset.pattern.permute.xlu0 0
        %1207 = vperm.xlu0 %1206, %v948
        %v1208 = vpop.permute.xlu0 %1207
        %1211 = vset.pattern.permute.xlu0 0
        %1212 = vperm.xlu0 %1211, %v949
        %v1213 = vpop.permute.xlu0 %1212
        %1216 = vset.pattern.permute.xlu0 0
        %1217 = vperm.xlu0 %1216, %v950
        %v1218 = vpop.permute.xlu0 %1217
        %1221 = vset.pattern.permute.xlu0 0
        %1222 = vperm.xlu0 %1221, %v951
        %v1223 = vpop.permute.xlu0 %1222
        %1226 = vset.pattern.permute.xlu0 0
        %1227 = vperm.xlu0 %1226, %v952
        %v1228 = vpop.permute.xlu0 %1227
        %1231 = vset.pattern.permute.xlu0 0
        %1232 = vperm.xlu0 %1231, %v953
        %v1233 = vpop.permute.xlu0 %1232
        %1236 = vset.pattern.permute.xlu0 0
        %1237 = vperm.xlu0 %1236, %v954
        %v1238 = vpop.permute.xlu0 %1237
        %1241 = vset.pattern.permute.xlu0 0
        %1242 = vperm.xlu0 %1241, %v955
        %v1243 = vpop.permute.xlu0 %1242
        %1246 = vset.pattern.permute.xlu0 0
        %1247 = vperm.xlu0 %1246, %v956
        %v1248 = vpop.permute.xlu0 %1247
        %1251 = vset.pattern.permute.xlu0 0
        %1252 = vperm.xlu0 %1251, %v957
        %v1253 = vpop.permute.xlu0 %1252
        %1256 = vset.pattern.permute.xlu0 0
        %1257 = vperm.xlu0 %1256, %v958
        %v1258 = vpop.permute.xlu0 %1257
        %1261 = vset.pattern.permute.xlu0 0
        %1262 = vperm.xlu0 %1261, %v959
        %v1263 = vpop.permute.xlu0 %1262
        %1266 = vset.pattern.permute.xlu0 0
        %1267 = vperm.xlu0 %1266, %v960
        %v1268 = vpop.permute.xlu0 %1267
        %1271 = vset.pattern.permute.xlu0 0
        %1272 = vperm.xlu0 %1271, %v961
        %v1273 = vpop.permute.xlu0 %1272
        %1276 = vset.pattern.permute.xlu0 0
        %1277 = vperm.xlu0 %1276, %v962
        %v1278 = vpop.permute.xlu0 %1277
        %1281 = vset.pattern.permute.xlu0 0
        %1282 = vperm.xlu0 %1281, %v963
        %v1283 = vpop.permute.xlu0 %1282
        %1286 = vset.pattern.permute.xlu0 0
        %1287 = vperm.xlu0 %1286, %v964
        %v1288 = vpop.permute.xlu0 %1287
        %1291 = vset.pattern.permute.xlu0 0
        %1292 = vperm.xlu0 %1291, %v965
        %v1293 = vpop.permute.xlu0 %1292
        %1296 = vset.pattern.permute.xlu0 0
        %1297 = vperm.xlu0 %1296, %v966
        %v1298 = vpop.permute.xlu0 %1297
        %1301 = vset.pattern.permute.xlu0 0
        %1302 = vperm.xlu0 %1301, %v967
        %v1303 = vpop.permute.xlu0 %1302
        %1306 = vset.pattern.permute.xlu0 0
        %1307 = vperm.xlu0 %1306, %v968
        %v1308 = vpop.permute.xlu0 %1307
        %1311 = vset.pattern.permute.xlu0 0
        %1312 = vperm.xlu0 %1311, %v969
        %v1313 = vpop.permute.xlu0 %1312
        %1316 = vset.pattern.permute.xlu0 0
        %1317 = vperm.xlu0 %1316, %v970
        %v1318 = vpop.permute.xlu0 %1317
        %1321 = vset.pattern.permute.xlu0 0
        %1322 = vperm.xlu0 %1321, %v971
        %v1323 = vpop.permute.xlu0 %1322
        %1326 = vset.pattern.permute.xlu0 0
        %1327 = vperm.xlu0 %1326, %v972
        %v1328 = vpop.permute.xlu0 %1327
        %1331 = vset.pattern.permute.xlu0 0
        %1332 = vperm.xlu0 %1331, %v973
        %v1333 = vpop.permute.xlu0 %1332
        %1336 = vset.pattern.permute.xlu0 0
        %1337 = vperm.xlu0 %1336, %v974
        %v1338 = vpop.permute.xlu0 %1337
        %1341 = vset.pattern.permute.xlu0 0
        %1342 = vperm.xlu0 %1341, %v975
        %v1343 = vpop.permute.xlu0 %1342
        %1346 = vset.pattern.permute.xlu0 0
        %1347 = vperm.xlu0 %1346, %v976
        %v1348 = vpop.permute.xlu0 %1347
        %1351 = vset.pattern.permute.xlu0 0
        %1352 = vperm.xlu0 %1351, %v977
        %v1353 = vpop.permute.xlu0 %1352
        %1356 = vset.pattern.permute.xlu0 0
        %1357 = vperm.xlu0 %1356, %v978
        %v1358 = vpop.permute.xlu0 %1357
        %1361 = vset.pattern.permute.xlu0 0
        %1362 = vperm.xlu0 %1361, %v979
        %v1363 = vpop.permute.xlu0 %1362
        %1366 = vset.pattern.permute.xlu0 0
        %1367 = vperm.xlu0 %1366, %v980
        %v1368 = vpop.permute.xlu0 %1367
        %1371 = vset.pattern.permute.xlu0 0
        %1372 = vperm.xlu0 %1371, %v981
        %v1373 = vpop.permute.xlu0 %1372
        %1376 = vset.pattern.permute.xlu0 0
        %1377 = vperm.xlu0 %1376, %v982
        %v1378 = vpop.permute.xlu0 %1377
        %1381 = vset.pattern.permute.xlu0 0
        %1382 = vperm.xlu0 %1381, %v983
        %v1383 = vpop.permute.xlu0 %1382
        %1386 = vset.pattern.permute.xlu0 0
        %1387 = vperm.xlu0 %1386, %v984
        %v1388 = vpop.permute.xlu0 %1387
        %1391 = vset.pattern.permute.xlu0 0
        %1392 = vperm.xlu0 %1391, %v985
        %v1393 = vpop.permute.xlu0 %1392
        %1396 = vset.pattern.permute.xlu0 0
        %1397 = vperm.xlu0 %1396, %v986
        %v1398 = vpop.permute.xlu0 %1397
        %1401 = vset.pattern.permute.xlu0 0
        %1402 = vperm.xlu0 %1401, %v987
        %v1403 = vpop.permute.xlu0 %1402
        %1406 = vset.pattern.permute.xlu0 0
        %1407 = vperm.xlu0 %1406, %v988
        %v1408 = vpop.permute.xlu0 %1407
        %1411 = vset.pattern.permute.xlu0 0
        %1412 = vperm.xlu0 %1411, %v989
        %v1413 = vpop.permute.xlu0 %1412
        %1416 = vset.pattern.permute.xlu0 0
        %1417 = vperm.xlu0 %1416, %v990
        %v1418 = vpop.permute.xlu0 %1417
        %1421 = vset.pattern.permute.xlu0 0
        %1422 = vperm.xlu0 %1421, %v991
        %v1423 = vpop.permute.xlu0 %1422
        %1426 = vset.pattern.permute.xlu0 0
        %1427 = vperm.xlu0 %1426, %v992
        %v1428 = vpop.permute.xlu0 %1427
        %1431 = vset.pattern.permute.xlu0 0
        %1432 = vperm.xlu0 %1431, %v993
        %v1433 = vpop.permute.xlu0 %1432
        %1436 = vset.pattern.permute.xlu0 0
        %1437 = vperm.xlu0 %1436, %v994
        %v1438 = vpop.permute.xlu0 %1437
        %1441 = vset.pattern.permute.xlu0 0
        %1442 = vperm.xlu0 %1441, %v995
        %v1443 = vpop.permute.xlu0 %1442
        %1446 = vset.pattern.permute.xlu0 0
        %1447 = vperm.xlu0 %1446, %v996
        %v1448 = vpop.permute.xlu0 %1447
        %1451 = vset.pattern.permute.xlu0 0
        %1452 = vperm.xlu0 %1451, %v997
        %v1453 = vpop.permute.xlu0 %1452
        %1456 = vset.pattern.permute.xlu0 0
        %1457 = vperm.xlu0 %1456, %v998
        %v1458 = vpop.permute.xlu0 %1457
        %1461 = vset.pattern.permute.xlu0 0
        %1462 = vperm.xlu0 %1461, %v999
        %v1463 = vpop.permute.xlu0 %1462
        %1466 = vset.pattern.permute.xlu0 0
        %1467 = vperm.xlu0 %1466, %v1000
        %v1468 = vpop.permute.xlu0 %1467
        %1471 = vset.pattern.permute.xlu0 0
        %1472 = vperm.xlu0 %1471, %v1001
        %v1473 = vpop.permute.xlu0 %1472
        %1476 = vset.pattern.permute.xlu0 0
        %1477 = vperm.xlu0 %1476, %v1002
        %v1478 = vpop.permute.xlu0 %1477
        %1481 = vset.pattern.permute.xlu0 0
        %1482 = vperm.xlu0 %1481, %v1003
        %v1483 = vpop.permute.xlu0 %1482
        %1486 = vset.pattern.permute.xlu0 0
        %1487 = vperm.xlu0 %1486, %v1004
        %v1488 = vpop.permute.xlu0 %1487
        %1491 = vset.pattern.permute.xlu0 0
        %1492 = vperm.xlu0 %1491, %v1005
        %v1493 = vpop.permute.xlu0 %1492
        %1496 = vset.pattern.permute.xlu0 0
        %1497 = vperm.xlu0 %1496, %v1006
        %v1498 = vpop.permute.xlu0 %1497
        %1501 = vset.pattern.permute.xlu0 0
        %1502 = vperm.xlu0 %1501, %v1007
        %v1503 = vpop.permute.xlu0 %1502
        %1506 = vset.pattern.permute.xlu0 0
        %1507 = vperm.xlu0 %1506, %v1008
        %v1508 = vpop.permute.xlu0 %1507
        %1511 = vset.pattern.permute.xlu0 0
        %1512 = vperm.xlu0 %1511, %v1009
        %v1513 = vpop.permute.xlu0 %1512
        %1516 = vset.pattern.permute.xlu0 0
        %1517 = vperm.xlu0 %1516, %v1010
        %v1518 = vpop.permute.xlu0 %1517
        %1521 = vset.pattern.permute.xlu0 0
        %1522 = vperm.xlu0 %1521, %v1011
        %v1523 = vpop.permute.xlu0 %1522
        %1526 = vset.pattern.permute.xlu0 0
        %1527 = vperm.xlu0 %1526, %v1012
        %v1528 = vpop.permute.xlu0 %1527
        %1531 = vset.pattern.permute.xlu0 0
        %1532 = vperm.xlu0 %1531, %v1013
        %v1533 = vpop.permute.xlu0 %1532
        %1536 = vset.pattern.permute.xlu0 0
        %1537 = vperm.xlu0 %1536, %v1014
        %v1538 = vpop.permute.xlu0 %1537
        %1541 = vset.pattern.permute.xlu0 0
        %1542 = vperm.xlu0 %1541, %v1015
        %v1543 = vpop.permute.xlu0 %1542
        %1546 = vset.pattern.permute.xlu0 0
        %1547 = vperm.xlu0 %1546, %v1016
        %v1548 = vpop.permute.xlu0 %1547
        %1551 = vset.pattern.permute.xlu0 0
        %1552 = vperm.xlu0 %1551, %v1017
        %v1553 = vpop.permute.xlu0 %1552
        %1556 = vset.pattern.permute.xlu0 0
        %1557 = vperm.xlu0 %1556, %v1018
        %v1558 = vpop.permute.xlu0 %1557
        %1561 = vset.pattern.permute.xlu0 0
        %1562 = vperm.xlu0 %1561, %v1019
        %v1563 = vpop.permute.xlu0 %1562
        %1566 = vset.pattern.permute.xlu0 0
        %1567 = vperm.xlu0 %1566, %v1020
        %v1568 = vpop.permute.xlu0 %1567
        %1571 = vset.pattern.permute.xlu0 0
        %1572 = vperm.xlu0 %1571, %v1021
        %v1573 = vpop.permute.xlu0 %1572
        %1576 = vset.pattern.permute.xlu0 0
        %1577 = vperm.xlu0 %1576, %v1022
        %v1578 = vpop.permute.xlu0 %1577
        %1581 = vset.pattern.permute.xlu0 0
        %1582 = vperm.xlu0 %1581, %v1023
        %v1583 = vpop.permute.xlu0 %1582
        %1586 = vset.pattern.permute.xlu0 0
        %1587 = vperm.xlu0 %1586, %v1024
        %v1588 = vpop.permute.xlu0 %1587
        %1591 = vset.pattern.permute.xlu0 0
        %1592 = vperm.xlu0 %1591, %v1025
        %v1593 = vpop.permute.xlu0 %1592
        %1596 = vset.pattern.permute.xlu0 0
        %1597 = vperm.xlu0 %1596, %v1026
        %v1598 = vpop.permute.xlu0 %1597
        %1601 = vset.pattern.permute.xlu0 0
        %1602 = vperm.xlu0 %1601, %v1027
        %v1603 = vpop.permute.xlu0 %1602
        %1606 = vset.pattern.permute.xlu0 0
        %1607 = vperm.xlu0 %1606, %v1028
        %v1608 = vpop.permute.xlu0 %1607
        %1611 = vset.pattern.permute.xlu0 0
        %1612 = vperm.xlu0 %1611, %v1029
        %v1613 = vpop.permute.xlu0 %1612
        %1616 = vset.pattern.permute.xlu0 0
        %1617 = vperm.xlu0 %1616, %v1030
        %v1618 = vpop.permute.xlu0 %1617
        %1621 = vset.pattern.permute.xlu0 0
        %1622 = vperm.xlu0 %1621, %v1031
        %v1623 = vpop.permute.xlu0 %1622
        %1626 = vset.pattern.permute.xlu0 0
        %1627 = vperm.xlu0 %1626, %v1032
        %v1628 = vpop.permute.xlu0 %1627
        %1631 = vset.pattern.permute.xlu0 0
        %1632 = vperm.xlu0 %1631, %v1033
        %v1633 = vpop.permute.xlu0 %1632
        %1636 = vset.pattern.permute.xlu0 0
        %1637 = vperm.xlu0 %1636, %v1034
        %v1638 = vpop.permute.xlu0 %1637
        %1641 = vset.pattern.permute.xlu0 0
        %1642 = vperm.xlu0 %1641, %v1035
        %v1643 = vpop.permute.xlu0 %1642
        %1646 = vset.pattern.permute.xlu0 0
        %1647 = vperm.xlu0 %1646, %v1036
        %v1648 = vpop.permute.xlu0 %1647
        %1651 = vset.pattern.permute.xlu0 0
        %1652 = vperm.xlu0 %1651, %v1037
        %v1653 = vpop.permute.xlu0 %1652
        %1656 = vset.pattern.permute.xlu0 0
        %1657 = vperm.xlu0 %1656, %v1038
        %v1658 = vpop.permute.xlu0 %1657
        %1661 = vset.pattern.permute.xlu0 0
        %1662 = vperm.xlu0 %1661, %v1039
        %v1663 = vpop.permute.xlu0 %1662
        %1666 = vset.pattern.permute.xlu0 0
        %1667 = vperm.xlu0 %1666, %v1040
        %v1668 = vpop.permute.xlu0 %1667
        %1671 = vset.pattern.permute.xlu0 0
        %1672 = vperm.xlu0 %1671, %v1041
        %v1673 = vpop.permute.xlu0 %1672
        %1676 = vset.pattern.permute.xlu0 0
        %1677 = vperm.xlu0 %1676, %v1042
        %v1678 = vpop.permute.xlu0 %1677
        %1681 = vset.pattern.permute.xlu0 0
        %1682 = vperm.xlu0 %1681, %v1043
        %v1683 = vpop.permute.xlu0 %1682
        %1686 = vset.pattern.permute.xlu0 0
        %1687 = vperm.xlu0 %1686, %v1044
        %v1688 = vpop.permute.xlu0 %1687
        %1691 = vset.pattern.permute.xlu0 0
        %1692 = vperm.xlu0 %1691, %v1045
        %v1693 = vpop.permute.xlu0 %1692
        %1696 = vset.pattern.permute.xlu0 0
        %1697 = vperm.xlu0 %1696, %v1046
        %v1698 = vpop.permute.xlu0 %1697
        %1701 = vset.pattern.permute.xlu0 0
        %1702 = vperm.xlu0 %1701, %v1047
        %v1703 = vpop.permute.xlu0 %1702
        %1706 = vset.pattern.permute.xlu0 0
        %1707 = vperm.xlu0 %1706, %v1048
        %v1708 = vpop.permute.xlu0 %1707
        %1711 = vset.pattern.permute.xlu0 0
        %1712 = vperm.xlu0 %1711, %v1049
        %v1713 = vpop.permute.xlu0 %1712
        %1716 = vset.pattern.permute.xlu0 0
        %1717 = vperm.xlu0 %1716, %v1050
        %v1718 = vpop.permute.xlu0 %1717
        %1721 = vset.pattern.permute.xlu0 0
        %1722 = vperm.xlu0 %1721, %v1051
        %v1723 = vpop.permute.xlu0 %1722
        %1726 = vset.pattern.permute.xlu0 0
        %1727 = vperm.xlu0 %1726, %v1052
        %v1728 = vpop.permute.xlu0 %1727
        %1731 = vset.pattern.permute.xlu0 0
        %1732 = vperm.xlu0 %1731, %v1053
        %v1733 = vpop.permute.xlu0 %1732
        %1736 = vset.pattern.permute.xlu0 0
        %1737 = vperm.xlu0 %1736, %v1054
        %v1738 = vpop.permute.xlu0 %1737
        %1741 = vset.pattern.permute.xlu0 0
        %1742 = vperm.xlu0 %1741, %v1055
        %v1743 = vpop.permute.xlu0 %1742
        %1746 = vset.pattern.permute.xlu0 0
        %1747 = vperm.xlu0 %1746, %v1056
        %v1748 = vpop.permute.xlu0 %1747
        %1751 = vset.pattern.permute.xlu0 0
        %1752 = vperm.xlu0 %1751, %v1057
        %v1753 = vpop.permute.xlu0 %1752
        %1756 = vset.pattern.permute.xlu0 0
        %1757 = vperm.xlu0 %1756, %v1058
        %v1758 = vpop.permute.xlu0 %1757
        %1761 = vset.pattern.permute.xlu0 0
        %1762 = vperm.xlu0 %1761, %v1059
        %v1763 = vpop.permute.xlu0 %1762
        %1766 = vset.pattern.permute.xlu0 0
        %1767 = vperm.xlu0 %1766, %v1060
        %v1768 = vpop.permute.xlu0 %1767
        %1771 = vset.pattern.permute.xlu0 0
        %1772 = vperm.xlu0 %1771, %v1061
        %v1773 = vpop.permute.xlu0 %1772
        %1776 = vset.pattern.permute.xlu0 0
        %1777 = vperm.xlu0 %1776, %v1062
        %v1778 = vpop.permute.xlu0 %1777
        %1781 = vset.pattern.permute.xlu0 0
        %1782 = vperm.xlu0 %1781, %v1063
        %v1783 = vpop.permute.xlu0 %1782
        %1786 = vset.pattern.permute.xlu0 0
        %1787 = vperm.xlu0 %1786, %v1064
        %v1788 = vpop.permute.xlu0 %1787
        %1791 = vset.pattern.permute.xlu0 0
        %1792 = vperm.xlu0 %1791, %v1065
        %v1793 = vpop.permute.xlu0 %1792
        %1796 = vset.pattern.permute.xlu0 0
        %1797 = vperm.xlu0 %1796, %v1066
        %v1798 = vpop.permute.xlu0 %1797
        %1801 = vset.pattern.permute.xlu0 0
        %1802 = vperm.xlu0 %1801, %v1067
        %v1803 = vpop.permute.xlu0 %1802
        %1806 = vset.pattern.permute.xlu0 0
        %1807 = vperm.xlu0 %1806, %v1068
        %v1808 = vpop.permute.xlu0 %1807
        %1811 = vset.pattern.permute.xlu0 0
        %1812 = vperm.xlu0 %1811, %v1069
        %v1813 = vpop.permute.xlu0 %1812
        %1816 = vset.pattern.permute.xlu0 0
        %1817 = vperm.xlu0 %1816, %v1070
        %v1818 = vpop.permute.xlu0 %1817
        %1821 = vset.pattern.permute.xlu0 0
        %1822 = vperm.xlu0 %1821, %v1071
        %v1823 = vpop.permute.xlu0 %1822
        %1826 = vset.pattern.permute.xlu0 0
        %1827 = vperm.xlu0 %1826, %v1072
        %v1828 = vpop.permute.xlu0 %1827
        %1831 = vset.pattern.permute.xlu0 0
        %1832 = vperm.xlu0 %1831, %v1073
        %v1833 = vpop.permute.xlu0 %1832
        %1836 = vset.pattern.permute.xlu0 0
        %1837 = vperm.xlu0 %1836, %v1074
        %v1838 = vpop.permute.xlu0 %1837
        %1841 = vset.pattern.permute.xlu0 0
        %1842 = vperm.xlu0 %1841, %v1075
        %v1843 = vpop.permute.xlu0 %1842
        %v1845 = vmul.f32 %v1076, %v1208
        %v1846 = vmul.f32 %v1077, %v1213
        %v1847 = vmul.f32 %v1078, %v1218
        %v1848 = vmul.f32 %v1079, %v1223
        %v1849 = vmul.f32 %v1080, %v1228
        %v1850 = vmul.f32 %v1081, %v1233
        %v1851 = vmul.f32 %v1082, %v1238
        %v1852 = vmul.f32 %v1083, %v1243
        %v1853 = vmul.f32 %v1084, %v1248
        %v1854 = vmul.f32 %v1085, %v1253
        %v1855 = vmul.f32 %v1086, %v1258
        %v1856 = vmul.f32 %v1087, %v1263
        %v1857 = vmul.f32 %v1088, %v1268
        %v1858 = vmul.f32 %v1089, %v1273
        %v1859 = vmul.f32 %v1090, %v1278
        %v1860 = vmul.f32 %v1091, %v1283
        %v1861 = vmul.f32 %v1092, %v1288
        %v1862 = vmul.f32 %v1093, %v1293
        %v1863 = vmul.f32 %v1094, %v1298
        %v1864 = vmul.f32 %v1095, %v1303
        %v1865 = vmul.f32 %v1096, %v1308
        %v1866 = vmul.f32 %v1097, %v1313
        %v1867 = vmul.f32 %v1098, %v1318
        %v1868 = vmul.f32 %v1099, %v1323
        %v1869 = vmul.f32 %v1100, %v1328
        %v1870 = vmul.f32 %v1101, %v1333
        %v1871 = vmul.f32 %v1102, %v1338
        %v1872 = vmul.f32 %v1103, %v1343
        %v1873 = vmul.f32 %v1104, %v1348
        %v1874 = vmul.f32 %v1105, %v1353
        %v1875 = vmul.f32 %v1106, %v1358
        %v1876 = vmul.f32 %v1107, %v1363
        %v1877 = vmul.f32 %v1108, %v1368
        %v1878 = vmul.f32 %v1109, %v1373
        %v1879 = vmul.f32 %v1110, %v1378
        %v1880 = vmul.f32 %v1111, %v1383
        %v1881 = vmul.f32 %v1112, %v1388
        %v1882 = vmul.f32 %v1113, %v1393
        %v1883 = vmul.f32 %v1114, %v1398
        %v1884 = vmul.f32 %v1115, %v1403
        %v1885 = vmul.f32 %v1116, %v1408
        %v1886 = vmul.f32 %v1117, %v1413
        %v1887 = vmul.f32 %v1118, %v1418
        %v1888 = vmul.f32 %v1119, %v1423
        %v1889 = vmul.f32 %v1120, %v1428
        %v1890 = vmul.f32 %v1121, %v1433
        %v1891 = vmul.f32 %v1122, %v1438
        %v1892 = vmul.f32 %v1123, %v1443
        %v1893 = vmul.f32 %v1124, %v1448
        %v1894 = vmul.f32 %v1125, %v1453
        %v1895 = vmul.f32 %v1126, %v1458
        %v1896 = vmul.f32 %v1127, %v1463
        %v1897 = vmul.f32 %v1128, %v1468
        %v1898 = vmul.f32 %v1129, %v1473
        %v1899 = vmul.f32 %v1130, %v1478
        %v1900 = vmul.f32 %v1131, %v1483
        %v1901 = vmul.f32 %v1132, %v1488
        %v1902 = vmul.f32 %v1133, %v1493
        %v1903 = vmul.f32 %v1134, %v1498
        %v1904 = vmul.f32 %v1135, %v1503
        %v1905 = vmul.f32 %v1136, %v1508
        %v1906 = vmul.f32 %v1137, %v1513
        %v1907 = vmul.f32 %v1138, %v1518
        %v1908 = vmul.f32 %v1139, %v1523
        %v1909 = vmul.f32 %v1140, %v1528
        %v1910 = vmul.f32 %v1141, %v1533
        %v1911 = vmul.f32 %v1142, %v1538
        %v1912 = vmul.f32 %v1143, %v1543
        %v1913 = vmul.f32 %v1144, %v1548
        %v1914 = vmul.f32 %v1145, %v1553
        %v1915 = vmul.f32 %v1146, %v1558
        %v1916 = vmul.f32 %v1147, %v1563
        %v1917 = vmul.f32 %v1148, %v1568
        %v1918 = vmul.f32 %v1149, %v1573
        %v1919 = vmul.f32 %v1150, %v1578
        %v1920 = vmul.f32 %v1151, %v1583
        %v1921 = vmul.f32 %v1152, %v1588
        %v1922 = vmul.f32 %v1153, %v1593
        %v1923 = vmul.f32 %v1154, %v1598
        %v1924 = vmul.f32 %v1155, %v1603
        %v1925 = vmul.f32 %v1156, %v1608
        %v1926 = vmul.f32 %v1157, %v1613
        %v1927 = vmul.f32 %v1158, %v1618
        %v1928 = vmul.f32 %v1159, %v1623
        %v1929 = vmul.f32 %v1160, %v1628
        %v1930 = vmul.f32 %v1161, %v1633
        %v1931 = vmul.f32 %v1162, %v1638
        %v1932 = vmul.f32 %v1163, %v1643
        %v1933 = vmul.f32 %v1164, %v1648
        %v1934 = vmul.f32 %v1165, %v1653
        %v1935 = vmul.f32 %v1166, %v1658
        %v1936 = vmul.f32 %v1167, %v1663
        %v1937 = vmul.f32 %v1168, %v1668
        %v1938 = vmul.f32 %v1169, %v1673
        %v1939 = vmul.f32 %v1170, %v1678
        %v1940 = vmul.f32 %v1171, %v1683
        %v1941 = vmul.f32 %v1172, %v1688
        %v1942 = vmul.f32 %v1173, %v1693
        %v1943 = vmul.f32 %v1174, %v1698
        %v1944 = vmul.f32 %v1175, %v1703
        %v1945 = vmul.f32 %v1176, %v1708
        %v1946 = vmul.f32 %v1177, %v1713
        %v1947 = vmul.f32 %v1178, %v1718
        %v1948 = vmul.f32 %v1179, %v1723
        %v1949 = vmul.f32 %v1180, %v1728
        %v1950 = vmul.f32 %v1181, %v1733
        %v1951 = vmul.f32 %v1182, %v1738
        %v1952 = vmul.f32 %v1183, %v1743
        %v1953 = vmul.f32 %v1184, %v1748
        %v1954 = vmul.f32 %v1185, %v1753
        %v1955 = vmul.f32 %v1186, %v1758
        %v1956 = vmul.f32 %v1187, %v1763
        %v1957 = vmul.f32 %v1188, %v1768
        %v1958 = vmul.f32 %v1189, %v1773
        %v1959 = vmul.f32 %v1190, %v1778
        %v1960 = vmul.f32 %v1191, %v1783
        %v1961 = vmul.f32 %v1192, %v1788
        %v1962 = vmul.f32 %v1193, %v1793
        %v1963 = vmul.f32 %v1194, %v1798
        %v1964 = vmul.f32 %v1195, %v1803
        %v1965 = vmul.f32 %v1196, %v1808
        %v1966 = vmul.f32 %v1197, %v1813
        %v1967 = vmul.f32 %v1198, %v1818
        %v1968 = vmul.f32 %v1199, %v1823
        %v1969 = vmul.f32 %v1200, %v1828
        %v1970 = vmul.f32 %v1201, %v1833
        %v1971 = vmul.f32 %v1202, %v1838
        %v1972 = vmul.f32 %v1203, %v1843
        %v1973 = vadd.f32 %v1845, %v1846
        %v1974 = vadd.f32 %v1973, %v1847
        %v1975 = vadd.f32 %v1974, %v1848
        %v1976 = vadd.f32 %v1975, %v1849
        %v1977 = vadd.f32 %v1976, %v1850
        %v1978 = vadd.f32 %v1977, %v1851
        %v1979 = vadd.f32 %v1978, %v1852
        %v1980 = vadd.f32 %v1979, %v1853
        %v1981 = vadd.f32 %v1980, %v1854
        %v1982 = vadd.f32 %v1981, %v1855
        %v1983 = vadd.f32 %v1982, %v1856
        %v1984 = vadd.f32 %v1983, %v1857
        %v1985 = vadd.f32 %v1984, %v1858
        %v1986 = vadd.f32 %v1985, %v1859
        %v1987 = vadd.f32 %v1986, %v1860
        %v1988 = vrot.slane %v1987, 4
        %v1989 = vadd.f32 %v1987, %v1988
        %v1990 = vrot.slane %v1989, 2
        %v1991 = vadd.f32 %v1989, %v1990
        %v1992 = vrot.slane %v1991, 1
        %v1993 = vadd.f32 %v1991, %v1992
        %v1994 = vadd.f32 %v1861, %v1862
        %v1995 = vadd.f32 %v1994, %v1863
        %v1996 = vadd.f32 %v1995, %v1864
        %v1997 = vadd.f32 %v1996, %v1865
        %v1998 = vadd.f32 %v1997, %v1866
        %v1999 = vadd.f32 %v1998, %v1867
        %v2000 = vadd.f32 %v1999, %v1868
        %v2001 = vadd.f32 %v2000, %v1869
        %v2002 = vadd.f32 %v2001, %v1870
        %v2003 = vadd.f32 %v2002, %v1871
        %v2004 = vadd.f32 %v2003, %v1872
        %v2005 = vadd.f32 %v2004, %v1873
        %v2006 = vadd.f32 %v2005, %v1874
        %v2007 = vadd.f32 %v2006, %v1875
        %v2008 = vadd.f32 %v2007, %v1876
        %v2009 = vrot.slane %v2008, 4
        %v2010 = vadd.f32 %v2008, %v2009
        %v2011 = vrot.slane %v2010, 2
        %v2012 = vadd.f32 %v2010, %v2011
        %v2013 = vrot.slane %v2012, 1
        %v2014 = vadd.f32 %v2012, %v2013
        %v2015 = vadd.f32 %v1877, %v1878
        %v2016 = vadd.f32 %v2015, %v1879
        %v2017 = vadd.f32 %v2016, %v1880
        %v2018 = vadd.f32 %v2017, %v1881
        %v2019 = vadd.f32 %v2018, %v1882
        %v2020 = vadd.f32 %v2019, %v1883
        %v2021 = vadd.f32 %v2020, %v1884
        %v2022 = vadd.f32 %v2021, %v1885
        %v2023 = vadd.f32 %v2022, %v1886
        %v2024 = vadd.f32 %v2023, %v1887
        %v2025 = vadd.f32 %v2024, %v1888
        %v2026 = vadd.f32 %v2025, %v1889
        %v2027 = vadd.f32 %v2026, %v1890
        %v2028 = vadd.f32 %v2027, %v1891
        %v2029 = vadd.f32 %v2028, %v1892
        %v2030 = vrot.slane %v2029, 4
        %v2031 = vadd.f32 %v2029, %v2030
        %v2032 = vrot.slane %v2031, 2
        %v2033 = vadd.f32 %v2031, %v2032
        %v2034 = vrot.slane %v2033, 1
        %v2035 = vadd.f32 %v2033, %v2034
        %v2036 = vadd.f32 %v1893, %v1894
        %v2037 = vadd.f32 %v2036, %v1895
        %v2038 = vadd.f32 %v2037, %v1896
        %v2039 = vadd.f32 %v2038, %v1897
        %v2040 = vadd.f32 %v2039, %v1898
        %v2041 = vadd.f32 %v2040, %v1899
        %v2042 = vadd.f32 %v2041, %v1900
        %v2043 = vadd.f32 %v2042, %v1901
        %v2044 = vadd.f32 %v2043, %v1902
        %v2045 = vadd.f32 %v2044, %v1903
        %v2046 = vadd.f32 %v2045, %v1904
        %v2047 = vadd.f32 %v2046, %v1905
        %v2048 = vadd.f32 %v2047, %v1906
        %v2049 = vadd.f32 %v2048, %v1907
        %v2050 = vadd.f32 %v2049, %v1908
        %v2051 = vrot.slane %v2050, 4
        %v2052 = vadd.f32 %v2050, %v2051
        %v2053 = vrot.slane %v2052, 2
        %v2054 = vadd.f32 %v2052, %v2053
        %v2055 = vrot.slane %v2054, 1
        %v2056 = vadd.f32 %v2054, %v2055
        %v2057 = vadd.f32 %v1909, %v1910
        %v2058 = vadd.f32 %v2057, %v1911
        %v2059 = vadd.f32 %v2058, %v1912
        %v2060 = vadd.f32 %v2059, %v1913
        %v2061 = vadd.f32 %v2060, %v1914
        %v2062 = vadd.f32 %v2061, %v1915
        %v2063 = vadd.f32 %v2062, %v1916
        %v2064 = vadd.f32 %v2063, %v1917
        %v2065 = vadd.f32 %v2064, %v1918
        %v2066 = vadd.f32 %v2065, %v1919
        %v2067 = vadd.f32 %v2066, %v1920
        %v2068 = vadd.f32 %v2067, %v1921
        %v2069 = vadd.f32 %v2068, %v1922
        %v2070 = vadd.f32 %v2069, %v1923
        %v2071 = vadd.f32 %v2070, %v1924
        %v2072 = vrot.slane %v2071, 4
        %v2073 = vadd.f32 %v2071, %v2072
        %v2074 = vrot.slane %v2073, 2
        %v2075 = vadd.f32 %v2073, %v2074
        %v2076 = vrot.slane %v2075, 1
        %v2077 = vadd.f32 %v2075, %v2076
        %v2078 = vadd.f32 %v1925, %v1926
        %v2079 = vadd.f32 %v2078, %v1927
        %v2080 = vadd.f32 %v2079, %v1928
        %v2081 = vadd.f32 %v2080, %v1929
        %v2082 = vadd.f32 %v2081, %v1930
        %v2083 = vadd.f32 %v2082, %v1931
        %v2084 = vadd.f32 %v2083, %v1932
        %v2085 = vadd.f32 %v2084, %v1933
        %v2086 = vadd.f32 %v2085, %v1934
        %v2087 = vadd.f32 %v2086, %v1935
        %v2088 = vadd.f32 %v2087, %v1936
        %v2089 = vadd.f32 %v2088, %v1937
        %v2090 = vadd.f32 %v2089, %v1938
        %v2091 = vadd.f32 %v2090, %v1939
        %v2092 = vadd.f32 %v2091, %v1940
        %v2093 = vrot.slane %v2092, 4
        %v2094 = vadd.f32 %v2092, %v2093
        %v2095 = vrot.slane %v2094, 2
        %v2096 = vadd.f32 %v2094, %v2095
        %v2097 = vrot.slane %v2096, 1
        %v2098 = vadd.f32 %v2096, %v2097
        %v2099 = vadd.f32 %v1941, %v1942
        %v2100 = vadd.f32 %v2099, %v1943
        %v2101 = vadd.f32 %v2100, %v1944
        %v2102 = vadd.f32 %v2101, %v1945
        %v2103 = vadd.f32 %v2102, %v1946
        %v2104 = vadd.f32 %v2103, %v1947
        %v2105 = vadd.f32 %v2104, %v1948
        %v2106 = vadd.f32 %v2105, %v1949
        %v2107 = vadd.f32 %v2106, %v1950
        %v2108 = vadd.f32 %v2107, %v1951
        %v2109 = vadd.f32 %v2108, %v1952
        %v2110 = vadd.f32 %v2109, %v1953
        %v2111 = vadd.f32 %v2110, %v1954
        %v2112 = vadd.f32 %v2111, %v1955
        %v2113 = vadd.f32 %v2112, %v1956
        %v2114 = vrot.slane %v2113, 4
        %v2115 = vadd.f32 %v2113, %v2114
        %v2116 = vrot.slane %v2115, 2
        %v2117 = vadd.f32 %v2115, %v2116
        %v2118 = vrot.slane %v2117, 1
        %v2119 = vadd.f32 %v2117, %v2118
        %v2120 = vadd.f32 %v1957, %v1958
        %v2121 = vadd.f32 %v2120, %v1959
        %v2122 = vadd.f32 %v2121, %v1960
        %v2123 = vadd.f32 %v2122, %v1961
        %v2124 = vadd.f32 %v2123, %v1962
        %v2125 = vadd.f32 %v2124, %v1963
        %v2126 = vadd.f32 %v2125, %v1964
        %v2127 = vadd.f32 %v2126, %v1965
        %v2128 = vadd.f32 %v2127, %v1966
        %v2129 = vadd.f32 %v2128, %v1967
        %v2130 = vadd.f32 %v2129, %v1968
        %v2131 = vadd.f32 %v2130, %v1969
        %v2132 = vadd.f32 %v2131, %v1970
        %v2133 = vadd.f32 %v2132, %v1971
        %v2134 = vadd.f32 %v2133, %v1972
        %v2135 = vrot.slane %v2134, 4
        %v2136 = vadd.f32 %v2134, %v2135
        %v2137 = vrot.slane %v2136, 2
        %v2138 = vadd.f32 %v2136, %v2137
        %v2139 = vrot.slane %v2138, 1
        %v2140 = vadd.f32 %v2138, %v2139
        %vm2149 = vcmask 1041409
        %v2150 = vsel %vm2149, %v2014, %v1993
        %vm2151 = vcmask 1042434
        %v2152 = vsel %vm2151, %v2035, %v2150
        %vm2153 = vcmask 1043459
        %v2154 = vsel %vm2153, %v2056, %v2152
        %vm2155 = vcmask 1044484
        %v2156 = vsel %vm2155, %v2077, %v2154
        %vm2157 = vcmask 1045509
        %v2158 = vsel %vm2157, %v2098, %v2156
        %vm2159 = vcmask 1046534
        %v2160 = vsel %vm2159, %v2119, %v2158
        %vm2161 = vcmask 1047559
        %v2162 = vsel %vm2161, %v2140, %v2160
        %v2164 = vadd.f32 %v1204, %v2162
        %2165 = vst [vmem:[%s800] sm:$0xff] %v2164
        %v2166 = vld [vmem:[%s812] sm:$0xff]
        %vm2167 = vcmask 7168
        %v2168 = vsel %vm2167, %v948, 0.0
        %v2169 = vsel %vm2167, %v949, 0.0
        %v2170 = vadd.f32 %v2168, %v2169
        %v2171 = vsel %vm2167, %v950, 0.0
        %v2172 = vadd.f32 %v2170, %v2171
        %v2173 = vsel %vm2167, %v951, 0.0
        %v2174 = vadd.f32 %v2172, %v2173
        %v2175 = vsel %vm2167, %v952, 0.0
        %v2176 = vadd.f32 %v2174, %v2175
        %v2177 = vsel %vm2167, %v953, 0.0
        %v2178 = vadd.f32 %v2176, %v2177
        %v2179 = vsel %vm2167, %v954, 0.0
        %v2180 = vadd.f32 %v2178, %v2179
        %v2181 = vsel %vm2167, %v955, 0.0
        %v2182 = vadd.f32 %v2180, %v2181
        %v2183 = vsel %vm2167, %v956, 0.0
        %v2184 = vadd.f32 %v2182, %v2183
        %v2185 = vsel %vm2167, %v957, 0.0
        %v2186 = vadd.f32 %v2184, %v2185
        %v2187 = vsel %vm2167, %v958, 0.0
        %v2188 = vadd.f32 %v2186, %v2187
        %v2189 = vsel %vm2167, %v959, 0.0
        %v2190 = vadd.f32 %v2188, %v2189
        %v2191 = vsel %vm2167, %v960, 0.0
        %v2192 = vadd.f32 %v2190, %v2191
        %v2193 = vsel %vm2167, %v961, 0.0
        %v2194 = vadd.f32 %v2192, %v2193
        %v2195 = vsel %vm2167, %v962, 0.0
        %v2196 = vadd.f32 %v2194, %v2195
        %v2197 = vsel %vm2167, %v963, 0.0
        %v2198 = vadd.f32 %v2196, %v2197
        %v2199 = vrot.slane %v2198, 4
        %v2200 = vadd.f32 %v2198, %v2199
        %v2201 = vrot.slane %v2200, 2
        %v2202 = vadd.f32 %v2200, %v2201
        %v2203 = vrot.slane %v2202, 1
        %v2204 = vadd.f32 %v2202, %v2203
        %v2205 = vsel %vm2167, %v964, 0.0
        %v2206 = vsel %vm2167, %v965, 0.0
        %v2207 = vadd.f32 %v2205, %v2206
        %v2208 = vsel %vm2167, %v966, 0.0
        %v2209 = vadd.f32 %v2207, %v2208
        %v2210 = vsel %vm2167, %v967, 0.0
        %v2211 = vadd.f32 %v2209, %v2210
        %v2212 = vsel %vm2167, %v968, 0.0
        %v2213 = vadd.f32 %v2211, %v2212
        %v2214 = vsel %vm2167, %v969, 0.0
        %v2215 = vadd.f32 %v2213, %v2214
        %v2216 = vsel %vm2167, %v970, 0.0
        %v2217 = vadd.f32 %v2215, %v2216
        %v2218 = vsel %vm2167, %v971, 0.0
        %v2219 = vadd.f32 %v2217, %v2218
        %v2220 = vsel %vm2167, %v972, 0.0
        %v2221 = vadd.f32 %v2219, %v2220
        %v2222 = vsel %vm2167, %v973, 0.0
        %v2223 = vadd.f32 %v2221, %v2222
        %v2224 = vsel %vm2167, %v974, 0.0
        %v2225 = vadd.f32 %v2223, %v2224
        %v2226 = vsel %vm2167, %v975, 0.0
        %v2227 = vadd.f32 %v2225, %v2226
        %v2228 = vsel %vm2167, %v976, 0.0
        %v2229 = vadd.f32 %v2227, %v2228
        %v2230 = vsel %vm2167, %v977, 0.0
        %v2231 = vadd.f32 %v2229, %v2230
        %v2232 = vsel %vm2167, %v978, 0.0
        %v2233 = vadd.f32 %v2231, %v2232
        %v2234 = vsel %vm2167, %v979, 0.0
        %v2235 = vadd.f32 %v2233, %v2234
        %v2236 = vrot.slane %v2235, 4
        %v2237 = vadd.f32 %v2235, %v2236
        %v2238 = vrot.slane %v2237, 2
        %v2239 = vadd.f32 %v2237, %v2238
        %v2240 = vrot.slane %v2239, 1
        %v2241 = vadd.f32 %v2239, %v2240
        %v2242 = vsel %vm2167, %v980, 0.0
        %v2243 = vsel %vm2167, %v981, 0.0
        %v2244 = vadd.f32 %v2242, %v2243
        %v2245 = vsel %vm2167, %v982, 0.0
        %v2246 = vadd.f32 %v2244, %v2245
        %v2247 = vsel %vm2167, %v983, 0.0
        %v2248 = vadd.f32 %v2246, %v2247
        %v2249 = vsel %vm2167, %v984, 0.0
        %v2250 = vadd.f32 %v2248, %v2249
        %v2251 = vsel %vm2167, %v985, 0.0
        %v2252 = vadd.f32 %v2250, %v2251
        %v2253 = vsel %vm2167, %v986, 0.0
        %v2254 = vadd.f32 %v2252, %v2253
        %v2255 = vsel %vm2167, %v987, 0.0
        %v2256 = vadd.f32 %v2254, %v2255
        %v2257 = vsel %vm2167, %v988, 0.0
        %v2258 = vadd.f32 %v2256, %v2257
        %v2259 = vsel %vm2167, %v989, 0.0
        %v2260 = vadd.f32 %v2258, %v2259
        %v2261 = vsel %vm2167, %v990, 0.0
        %v2262 = vadd.f32 %v2260, %v2261
        %v2263 = vsel %vm2167, %v991, 0.0
        %v2264 = vadd.f32 %v2262, %v2263
        %v2265 = vsel %vm2167, %v992, 0.0
        %v2266 = vadd.f32 %v2264, %v2265
        %v2267 = vsel %vm2167, %v993, 0.0
        %v2268 = vadd.f32 %v2266, %v2267
        %v2269 = vsel %vm2167, %v994, 0.0
        %v2270 = vadd.f32 %v2268, %v2269
        %v2271 = vsel %vm2167, %v995, 0.0
        %v2272 = vadd.f32 %v2270, %v2271
        %v2273 = vrot.slane %v2272, 4
        %v2274 = vadd.f32 %v2272, %v2273
        %v2275 = vrot.slane %v2274, 2
        %v2276 = vadd.f32 %v2274, %v2275
        %v2277 = vrot.slane %v2276, 1
        %v2278 = vadd.f32 %v2276, %v2277
        %v2279 = vsel %vm2167, %v996, 0.0
        %v2280 = vsel %vm2167, %v997, 0.0
        %v2281 = vadd.f32 %v2279, %v2280
        %v2282 = vsel %vm2167, %v998, 0.0
        %v2283 = vadd.f32 %v2281, %v2282
        %v2284 = vsel %vm2167, %v999, 0.0
        %v2285 = vadd.f32 %v2283, %v2284
        %v2286 = vsel %vm2167, %v1000, 0.0
        %v2287 = vadd.f32 %v2285, %v2286
        %v2288 = vsel %vm2167, %v1001, 0.0
        %v2289 = vadd.f32 %v2287, %v2288
        %v2290 = vsel %vm2167, %v1002, 0.0
        %v2291 = vadd.f32 %v2289, %v2290
        %v2292 = vsel %vm2167, %v1003, 0.0
        %v2293 = vadd.f32 %v2291, %v2292
        %v2294 = vsel %vm2167, %v1004, 0.0
        %v2295 = vadd.f32 %v2293, %v2294
        %v2296 = vsel %vm2167, %v1005, 0.0
        %v2297 = vadd.f32 %v2295, %v2296
        %v2298 = vsel %vm2167, %v1006, 0.0
        %v2299 = vadd.f32 %v2297, %v2298
        %v2300 = vsel %vm2167, %v1007, 0.0
        %v2301 = vadd.f32 %v2299, %v2300
        %v2302 = vsel %vm2167, %v1008, 0.0
        %v2303 = vadd.f32 %v2301, %v2302
        %v2304 = vsel %vm2167, %v1009, 0.0
        %v2305 = vadd.f32 %v2303, %v2304
        %v2306 = vsel %vm2167, %v1010, 0.0
        %v2307 = vadd.f32 %v2305, %v2306
        %v2308 = vsel %vm2167, %v1011, 0.0
        %v2309 = vadd.f32 %v2307, %v2308
        %v2310 = vrot.slane %v2309, 4
        %v2311 = vadd.f32 %v2309, %v2310
        %v2312 = vrot.slane %v2311, 2
        %v2313 = vadd.f32 %v2311, %v2312
        %v2314 = vrot.slane %v2313, 1
        %v2315 = vadd.f32 %v2313, %v2314
        %v2316 = vsel %vm2167, %v1012, 0.0
        %v2317 = vsel %vm2167, %v1013, 0.0
        %v2318 = vadd.f32 %v2316, %v2317
        %v2319 = vsel %vm2167, %v1014, 0.0
        %v2320 = vadd.f32 %v2318, %v2319
        %v2321 = vsel %vm2167, %v1015, 0.0
        %v2322 = vadd.f32 %v2320, %v2321
        %v2323 = vsel %vm2167, %v1016, 0.0
        %v2324 = vadd.f32 %v2322, %v2323
        %v2325 = vsel %vm2167, %v1017, 0.0
        %v2326 = vadd.f32 %v2324, %v2325
        %v2327 = vsel %vm2167, %v1018, 0.0
        %v2328 = vadd.f32 %v2326, %v2327
        %v2329 = vsel %vm2167, %v1019, 0.0
        %v2330 = vadd.f32 %v2328, %v2329
        %v2331 = vsel %vm2167, %v1020, 0.0
        %v2332 = vadd.f32 %v2330, %v2331
        %v2333 = vsel %vm2167, %v1021, 0.0
        %v2334 = vadd.f32 %v2332, %v2333
        %v2335 = vsel %vm2167, %v1022, 0.0
        %v2336 = vadd.f32 %v2334, %v2335
        %v2337 = vsel %vm2167, %v1023, 0.0
        %v2338 = vadd.f32 %v2336, %v2337
        %v2339 = vsel %vm2167, %v1024, 0.0
        %v2340 = vadd.f32 %v2338, %v2339
        %v2341 = vsel %vm2167, %v1025, 0.0
        %v2342 = vadd.f32 %v2340, %v2341
        %v2343 = vsel %vm2167, %v1026, 0.0
        %v2344 = vadd.f32 %v2342, %v2343
        %v2345 = vsel %vm2167, %v1027, 0.0
        %v2346 = vadd.f32 %v2344, %v2345
        %v2347 = vrot.slane %v2346, 4
        %v2348 = vadd.f32 %v2346, %v2347
        %v2349 = vrot.slane %v2348, 2
        %v2350 = vadd.f32 %v2348, %v2349
        %v2351 = vrot.slane %v2350, 1
        %v2352 = vadd.f32 %v2350, %v2351
        %v2353 = vsel %vm2167, %v1028, 0.0
        %v2354 = vsel %vm2167, %v1029, 0.0
        %v2355 = vadd.f32 %v2353, %v2354
        %v2356 = vsel %vm2167, %v1030, 0.0
        %v2357 = vadd.f32 %v2355, %v2356
        %v2358 = vsel %vm2167, %v1031, 0.0
        %v2359 = vadd.f32 %v2357, %v2358
        %v2360 = vsel %vm2167, %v1032, 0.0
        %v2361 = vadd.f32 %v2359, %v2360
        %v2362 = vsel %vm2167, %v1033, 0.0
        %v2363 = vadd.f32 %v2361, %v2362
        %v2364 = vsel %vm2167, %v1034, 0.0
        %v2365 = vadd.f32 %v2363, %v2364
        %v2366 = vsel %vm2167, %v1035, 0.0
        %v2367 = vadd.f32 %v2365, %v2366
        %v2368 = vsel %vm2167, %v1036, 0.0
        %v2369 = vadd.f32 %v2367, %v2368
        %v2370 = vsel %vm2167, %v1037, 0.0
        %v2371 = vadd.f32 %v2369, %v2370
        %v2372 = vsel %vm2167, %v1038, 0.0
        %v2373 = vadd.f32 %v2371, %v2372
        %v2374 = vsel %vm2167, %v1039, 0.0
        %v2375 = vadd.f32 %v2373, %v2374
        %v2376 = vsel %vm2167, %v1040, 0.0
        %v2377 = vadd.f32 %v2375, %v2376
        %v2378 = vsel %vm2167, %v1041, 0.0
        %v2379 = vadd.f32 %v2377, %v2378
        %v2380 = vsel %vm2167, %v1042, 0.0
        %v2381 = vadd.f32 %v2379, %v2380
        %v2382 = vsel %vm2167, %v1043, 0.0
        %v2383 = vadd.f32 %v2381, %v2382
        %v2384 = vrot.slane %v2383, 4
        %v2385 = vadd.f32 %v2383, %v2384
        %v2386 = vrot.slane %v2385, 2
        %v2387 = vadd.f32 %v2385, %v2386
        %v2388 = vrot.slane %v2387, 1
        %v2389 = vadd.f32 %v2387, %v2388
        %v2390 = vsel %vm2167, %v1044, 0.0
        %v2391 = vsel %vm2167, %v1045, 0.0
        %v2392 = vadd.f32 %v2390, %v2391
        %v2393 = vsel %vm2167, %v1046, 0.0
        %v2394 = vadd.f32 %v2392, %v2393
        %v2395 = vsel %vm2167, %v1047, 0.0
        %v2396 = vadd.f32 %v2394, %v2395
        %v2397 = vsel %vm2167, %v1048, 0.0
        %v2398 = vadd.f32 %v2396, %v2397
        %v2399 = vsel %vm2167, %v1049, 0.0
        %v2400 = vadd.f32 %v2398, %v2399
        %v2401 = vsel %vm2167, %v1050, 0.0
        %v2402 = vadd.f32 %v2400, %v2401
        %v2403 = vsel %vm2167, %v1051, 0.0
        %v2404 = vadd.f32 %v2402, %v2403
        %v2405 = vsel %vm2167, %v1052, 0.0
        %v2406 = vadd.f32 %v2404, %v2405
        %v2407 = vsel %vm2167, %v1053, 0.0
        %v2408 = vadd.f32 %v2406, %v2407
        %v2409 = vsel %vm2167, %v1054, 0.0
        %v2410 = vadd.f32 %v2408, %v2409
        %v2411 = vsel %vm2167, %v1055, 0.0
        %v2412 = vadd.f32 %v2410, %v2411
        %v2413 = vsel %vm2167, %v1056, 0.0
        %v2414 = vadd.f32 %v2412, %v2413
        %v2415 = vsel %vm2167, %v1057, 0.0
        %v2416 = vadd.f32 %v2414, %v2415
        %v2417 = vsel %vm2167, %v1058, 0.0
        %v2418 = vadd.f32 %v2416, %v2417
        %v2419 = vsel %vm2167, %v1059, 0.0
        %v2420 = vadd.f32 %v2418, %v2419
        %v2421 = vrot.slane %v2420, 4
        %v2422 = vadd.f32 %v2420, %v2421
        %v2423 = vrot.slane %v2422, 2
        %v2424 = vadd.f32 %v2422, %v2423
        %v2425 = vrot.slane %v2424, 1
        %v2426 = vadd.f32 %v2424, %v2425
        %v2427 = vsel %vm2167, %v1060, 0.0
        %v2428 = vsel %vm2167, %v1061, 0.0
        %v2429 = vadd.f32 %v2427, %v2428
        %v2430 = vsel %vm2167, %v1062, 0.0
        %v2431 = vadd.f32 %v2429, %v2430
        %v2432 = vsel %vm2167, %v1063, 0.0
        %v2433 = vadd.f32 %v2431, %v2432
        %v2434 = vsel %vm2167, %v1064, 0.0
        %v2435 = vadd.f32 %v2433, %v2434
        %v2436 = vsel %vm2167, %v1065, 0.0
        %v2437 = vadd.f32 %v2435, %v2436
        %v2438 = vsel %vm2167, %v1066, 0.0
        %v2439 = vadd.f32 %v2437, %v2438
        %v2440 = vsel %vm2167, %v1067, 0.0
        %v2441 = vadd.f32 %v2439, %v2440
        %v2442 = vsel %vm2167, %v1068, 0.0
        %v2443 = vadd.f32 %v2441, %v2442
        %v2444 = vsel %vm2167, %v1069, 0.0
        %v2445 = vadd.f32 %v2443, %v2444
        %v2446 = vsel %vm2167, %v1070, 0.0
        %v2447 = vadd.f32 %v2445, %v2446
        %v2448 = vsel %vm2167, %v1071, 0.0
        %v2449 = vadd.f32 %v2447, %v2448
        %v2450 = vsel %vm2167, %v1072, 0.0
        %v2451 = vadd.f32 %v2449, %v2450
        %v2452 = vsel %vm2167, %v1073, 0.0
        %v2453 = vadd.f32 %v2451, %v2452
        %v2454 = vsel %vm2167, %v1074, 0.0
        %v2455 = vadd.f32 %v2453, %v2454
        %v2456 = vsel %vm2167, %v1075, 0.0
        %v2457 = vadd.f32 %v2455, %v2456
        %v2458 = vrot.slane %v2457, 4
        %v2459 = vadd.f32 %v2457, %v2458
        %v2460 = vrot.slane %v2459, 2
        %v2461 = vadd.f32 %v2459, %v2460
        %v2462 = vrot.slane %v2461, 1
        %v2463 = vadd.f32 %v2461, %v2462
        %v2472 = vsel %vm2149, %v2241, %v2204
        %v2473 = vsel %vm2151, %v2278, %v2472
        %v2474 = vsel %vm2153, %v2315, %v2473
        %v2475 = vsel %vm2155, %v2352, %v2474
        %v2476 = vsel %vm2157, %v2389, %v2475
        %v2477 = vsel %vm2159, %v2426, %v2476
        %v2478 = vsel %vm2161, %v2463, %v2477
        %v2480 = vadd.f32 %v2166, %v2478
        %2481 = vst.msk [vmem:[%s812] sm:$0xff] %vm2167, %v2480
        %s2482 = sand.u32 %s95, 1
        %s2483 = scalar_lea.sflag [#allocation5], %s2482
        %s2484 = sand.u32 %s95, 1
        %s2485 = smul.addr %s2484, 8
        %s2486 = scalar_lea.vmem [#allocation6], %s2485
        %p2487 = scmp.lt.s32.totalorder %s25, 1
        %s2488 = scalar_select %p2487, %s25, 1
        %s2489 = smul.addr %s2488, 8
        %s2490 = scalar_lea.vmem %s3, %s2489
        // Predicated region
        $region78: #{tpu_custom_call.1} parent=64 // pred_check
          %p2491 = pneg %p105
        $region79: #{tpu_custom_call.1} parent=64 // pred_check_branch
          %2493 = sbr.rel (%p2491) target = $region81
        $region80: #{tpu_custom_call.1} parent=64 // pred_region
          %s2495 = ssub.s32 128, 128
          %2496 = vsyncadd %s2483, %s2495
          %s2497 = smul.addr %s25, 128
          %s2498 = scalar_lea.hbm %s2, %s2497
          %s2500 = sshll.u32 %s2486, 4
          %s2501 = int_to_ptr.vmem [resolvable:$true] %s2500
          %2503 = dma.vmem_to_hbm [thread:$0]  %s2501, 128, %s2498, %s2483
        $region81: #{tpu_custom_call.1} parent=64 // pred_fallthru
          _
        // Predicated region
        $region82: #{tpu_custom_call.1} parent=64 // pred_check
          %p2504 = pneg %p131
        $region83: #{tpu_custom_call.1} parent=64 // pred_check_branch
          %2506 = sbr.rel (%p2504) target = $region85
        $region84: #{tpu_custom_call.1} parent=64 // pred_region
          _
        $region85: #{tpu_custom_call.1} parent=64 // pred_fallthru
          _
      $region65: #{tpu_custom_call.1} parent=5 // pred_fallthru
        _
      %p2507 = scmp.le.s32.totalorder 2, %s16
      // Predicated region
      $region86: #{tpu_custom_call.1} parent=5 // pred_check
        %p2508 = pneg %p2507
      $region87: #{tpu_custom_call.1} parent=5 // pred_check_branch
        %2510 = sbr.rel (%p2508) target = $region89
      $region88: #{tpu_custom_call.1} parent=5 // pred_region
        %s2511 = ssub.s32 %s16, 2
        // Predicated region
        $region90: #{tpu_custom_call.1} parent=88 // pred_check
          %p2512 = pneg %p111
        $region91: #{tpu_custom_call.1} parent=88 // pred_check_branch
          %2514 = sbr.rel (%p2512) target = $region93
        $region92: #{tpu_custom_call.1} parent=88 // pred_region
          %s2515 = sand.u32 %s96, 1
          %s2516 = scalar_lea.sflag [#allocation5], %s2515
          %s2517 = sand.u32 %s96, 1
          %s2518 = smul.addr %s2517, 8
          %s2519 = scalar_lea.vmem [#allocation6], %s2518
          %2520 = dma.done %s2516, 128
        $region93: #{tpu_custom_call.1} parent=88 // pred_fallthru
          _
        // Predicated region
        $region94: #{tpu_custom_call.1} parent=88 // pred_check
          %p2521 = pneg %p137
        $region95: #{tpu_custom_call.1} parent=88 // pred_check_branch
          %2523 = sbr.rel (%p2521) target = $region97
        $region96: #{tpu_custom_call.1} parent=88 // pred_region
          %p2524 = scmp.lt.s32.totalorder %s27, 1
          %s2525 = scalar_select %p2524, %s27, 1
          %s2526 = smul.addr %s2525, 8
          %s2527 = scalar_lea.vmem %s3, %s2526
        $region97: #{tpu_custom_call.1} parent=88 // pred_fallthru
          _
      $region89: #{tpu_custom_call.1} parent=5 // pred_fallthru
        _
    $region6: #{tpu_custom_call.1} parent=1 // loop_footer
      %s20 = sadd.s32 1, %s16
    $region7: #{tpu_custom_call.1} parent=1 // loop_footer_branch
      %15 = sbr.rel target = $region3
    $region8: #{tpu_custom_call.1} parent=1 // loop_exit
      _
    %2528 = vsyncpa [#allocation4], 1
    %s2529 = scalar_lea.sflag [#allocation4], 1
    %2530 = vsyncpa %s2529, 1
    %2531 = vsyncpa [#allocation5], 1
    %s2532 = scalar_lea.sflag [#allocation5], 1
    %2533 = vsyncpa %s2532, 1

</llo_original>
